<compile_context>
chip_gen: v6e
topology: v6e:2x2x1
jax: 0.10.0
libtpu: 0.0.40
codegen_flags: <defaults>
</compile_context>

<pallas_src>
import functools

import jax
import jax.numpy as jnp
from jax.experimental import pallas as pl
from jax.experimental.pallas import tpu as pltpu

LANE = 128
SUBLANE = 8

# Double-buffered VMEM budget for all 10 input blocks of the fused kernel.
# 16 MiB -> pixel-row tile R = 680 for f32 720p-style inputs, i.e. ~1.0 MiB per
# image block (meets the >=1 MiB roofline target) and ~0.7 MiB per MV block,
# leaving headroom under v7x's 32 MiB scoped VMEM for outputs + compiler spill.
_VMEM_INPUT_BUDGET = 16 * 1024 * 1024
_VMEM_LIMIT_BYTES = 32 * 1024 * 1024
# Keep at least this many grid steps (when the tensors allow it) so v7x's two
# TensorCores each receive several blocks under dimension_semantics="parallel".
_MIN_GRID_STEPS = 8


def _round_up(x, m):
    return ((x + m - 1) // m) * m


def _pick_pixel_rows(p_total, batch, row_bytes_db, gran):
    """Pixel-row tile: biggest tile inside the VMEM budget, but small enough to
    leave >= ~_MIN_GRID_STEPS total grid steps; multiple of `gran` (8 for f32)."""
    r_budget = max(gran, (_VMEM_INPUT_BUDGET // row_bytes_db) // gran * gran)
    blocks_per_batch = pl.cdiv(_MIN_GRID_STEPS, max(batch, 1))
    r_split = max(gran, _round_up(pl.cdiv(p_total, blocks_per_batch), gran))
    r = min(r_budget, r_split)
    if r >= p_total:
        return p_total          # single pixel block per batch (full dim, any size)
    return r                    # multiple of gran; partial last block masked in-kernel


# --------------------------------------------------------------------------
# Fused kernel: one grid step = one (batch, pixel-block).
# --------------------------------------------------------------------------
def _fused_loss_kernel(den_ref, ref_ref, pden_ref, pref_ref,
                       tra_ref, occ_ref, ptra1_ref, pocc1_ref,
                       ptra2_ref, pocc2_ref,
                       sp_ref, tp_ref, msum_ref, mcnt_ref,
                       *, pix_rows, pix_total):
    last_partial = (pix_total % pix_rows) != 0
    if last_partial:
        # Pixel rows past the true extent hold unspecified data -> mask them.
        rows = (jax.lax.broadcasted_iota(jnp.int32, (pix_rows, LANE), 0)
                + pl.program_id(1) * pix_rows)
        valid = rows < pix_total                                   # (R, 128)

    def guard(x, zero):
        return jnp.where(valid[None], x, zero) if last_partial else x

    def fold(x):
        # (C, R, 128) -> (S, 128) partial sum, VPU-only vreg adds.
        x = x.sum(axis=0)                                          # (R, 128)
        if pix_rows % SUBLANE == 0:
            # Regroups whole (8,128) tiles only: layout-preserving, no VMEM copy.
            x = x.reshape(pix_rows // SUBLANE, SUBLANE, LANE).sum(axis=0)
        return x

    f32 = jnp.float32

    # 1) spatial L1 partial: sum |den - ref|
    d_sp = jnp.abs(den_ref[0].astype(f32) - ref_ref[0].astype(f32))
    sp_ref[0, 0] = fold(guard(d_sp, 0.0))

    # 2) temporal L1 partial: sum |(den - prevDen) - (ref - prevRef)|
    d_tp = jnp.abs((den_ref[0].astype(f32) - pden_ref[0].astype(f32))
                   - (ref_ref[0].astype(f32) - pref_ref[0].astype(f32)))
    tp_ref[0, 0] = fold(guard(d_tp, 0.0))

    # 3) per-pixel mask from the raw occ/tra pairs (2 MV channels -> one value
    #    shared across the 3 image channels), all VPU compare/select.
    def pair_hit(occ_r, tra_r, hit):
        d = jnp.abs(occ_r[0].astype(f32) - tra_r[0].astype(f32))   # (2, R, 128)
        m = jnp.where(d > 0.5, 1.0, 0.0)
        return jnp.where((m[0] + m[1]) > 0.0, f32(hit), 0.0)       # (R, 128)

    mask = (pair_hit(occ_ref, tra_ref, 1.0)
            + pair_hit(pocc1_ref, ptra1_ref, 0.8)
            + pair_hit(pocc2_ref, ptra2_ref, 0.6))

    # 4) masked positive sum + count.  |den-ref| is recomputed from the VMEM
    #    input buffers: cheaper than keeping d_sp live across the mask compute.
    lm = jnp.abs(den_ref[0].astype(f32) - ref_ref[0].astype(f32)) * mask[None]
    pos = lm > 0.0
    msum_ref[0, 0] = fold(guard(jnp.where(pos, lm, 0.0), 0.0))
    mcnt_ref[0, 0] = fold(guard(pos.astype(jnp.int32), 0))


# --------------------------------------------------------------------------
# Wrapper
# --------------------------------------------------------------------------
def _fused_loss_partials(den, ref, pden, pref, tra, occ, ptra1, pocc1, ptra2, pocc2):
    batch, chan, h, w = den.shape
    mvc = tra.shape[1]        # module semantics require 2 MV channels
    hw = h * w
    pad = (-hw) % LANE
    p_total = (hw + pad) // LANE

    def prep(x):
        b, c = x.shape[0], x.shape[1]
        x = x.reshape(b, c, hw)                 # free (bitcast) for contiguous inputs
        if pad:
            # zero pad: contributes 0 to every sum and is never "positive"
            x = jnp.pad(x, ((0, 0), (0, 0), (0, pad)))
        return x.reshape(b, c, p_total, LANE)

    imgs = [prep(x) for x in (den, ref, pden, pref)]
    mvs = [prep(x) for x in (tra, occ, ptra1, pocc1, ptra2, pocc2)]

    itemsize_min = min(jnp.dtype(a.dtype).itemsize for a in imgs + mvs)
    gran = SUBLANE * max(1, 4 // itemsize_min)        # packed-sublane minimum
    # double-buffered bytes of all input blocks, per pixel row
    row_bytes_db = 2 * LANE * sum(a.shape[1] * jnp.dtype(a.dtype).itemsize
                                  for a in imgs + mvs)
    r = _pick_pixel_rows(p_total, batch, row_bytes_db, gran)
    n_pix_blocks = pl.cdiv(p_total, r)
    s = SUBLANE if r % SUBLANE == 0 else r            # rows of each partial output

    img_spec = pl.BlockSpec((1, chan, r, LANE), lambda b, j: (b, 0, j, 0))
    mv_spec = pl.BlockSpec((1, mvc, r, LANE), lambda b, j: (b, 0, j, 0))
    out_spec = pl.BlockSpec((1, 1, s, LANE), lambda b, j: (b, j, 0, 0))
    f32_out = jax.ShapeDtypeStruct((batch, n_pix_blocks, s, LANE), jnp.float32)
    i32_out = jax.ShapeDtypeStruct((batch, n_pix_blocks, s, LANE), jnp.int32)

    sp_p, tp_p, ms_p, mc_p = pl.pallas_call(
        functools.partial(_fused_loss_kernel, pix_rows=r, pix_total=p_total),
        out_shape=(f32_out, f32_out, f32_out, i32_out),
        grid_spec=pltpu.PrefetchScalarGridSpec(
            num_scalar_prefetch=0,
            grid=(batch, n_pix_blocks),
            in_specs=[img_spec] * 4 + [mv_spec] * 6,
            out_specs=[out_spec, out_spec, out_spec, out_spec]),
        compiler_params=pltpu.CompilerParams(
            dimension_semantics=("parallel", "parallel"),
            vmem_limit_bytes=_VMEM_LIMIT_BYTES),
    )(*imgs, *mvs)

    # Tiny final cross-lane reduces happen here, outside the kernel.
    return jnp.sum(sp_p), jnp.sum(tp_p), jnp.sum(ms_p), jnp.sum(mc_p)


def loss_func_forward(denoise, reference, prevRef, prevDenoise, noise,
                      traMV, occMV, preTraMV1, preOccMV1, preTraMV2, preOccMV2):
    """LossFunc.forward -> (loss_spatial, loss_temporal, loss_maskL1)."""
    del noise  # unused by the reference forward (only LossAsym would use it)

    sp_sum, tp_sum, m_sum, m_cnt = _fused_loss_partials(
        denoise, reference, prevDenoise, prevRef,
        traMV, occMV, preTraMV1, preOccMV1, preTraMV2, preOccMV2)

    n = denoise.size
    loss_spatial = sp_sum / jnp.float32(n)
    loss_temporal = tp_sum / jnp.float32(n)

    # TODO(synk): the lossL1matrix[0,0,0,0]=1e-4 poke and the <0.002 clamp are
    # scalar fixups in plain JAX (exactly reproduces the PyTorch semantics).
    def pair_hit00(occ, tra, hit):
        m0 = jnp.where(jnp.abs(occ[0, 0, 0, 0] - tra[0, 0, 0, 0]) > 0.5, 1.0, 0.0)
        m1 = jnp.where(jnp.abs(occ[0, 1, 0, 0] - tra[0, 1, 0, 0]) > 0.5, 1.0, 0.0)
        return jnp.where((m0 + m1) > 0.0, jnp.float32(hit), 0.0)

    mask00 = (pair_hit00(occMV, traMV, 1.0)
              + pair_hit00(preOccMV1, preTraMV1, 0.8)
              + pair_hit00(preOccMV2, preTraMV2, 0.6))
    v00 = jnp.abs(denoise[0, 0, 0, 0].astype(jnp.float32)
                  - reference[0, 0, 0, 0].astype(jnp.float32)) * mask00
    pos00 = v00 > 0.0
    m_sum = m_sum - jnp.where(pos00, v00, 0.0) + jnp.float32(1e-4)
    m_cnt = m_cnt - jnp.where(pos00, 1, 0) + 1

    loss_m = m_sum / jnp.maximum(m_cnt.astype(jnp.float32), 1.0)
    loss_m = jnp.where(loss_m < 0.002, jnp.float32(0.0), loss_m)
    return loss_spatial, loss_temporal, loss_m


if __name__ == "__main__":
    key = jax.random.PRNGKey(0)
    ks = jax.random.split(key, 11)
    img = (2, 3, 16, 16)   # NCHW image-style tensors
    mv = (2, 2, 16, 16)    # 2-channel motion-vector / occlusion maps

    denoise = jax.random.normal(ks[0], img, dtype=jnp.float32)
    reference = jax.random.normal(ks[1], img, dtype=jnp.float32)
    prevRef = jax.random.normal(ks[2], img, dtype=jnp.float32)
    prevDenoise = jax.random.normal(ks[3], img, dtype=jnp.float32)
    noise = jax.random.normal(ks[4], img, dtype=jnp.float32)
    traMV = jax.random.normal(ks[5], mv, dtype=jnp.float32)
    occMV = jax.random.normal(ks[6], mv, dtype=jnp.float32)
    preTraMV1 = jax.random.normal(ks[7], mv, dtype=jnp.float32)
    preOccMV1 = jax.random.normal(ks[8], mv, dtype=jnp.float32)
    preTraMV2 = jax.random.normal(ks[9], mv, dtype=jnp.float32)
    preOccMV2 = jax.random.normal(ks[10], mv, dtype=jnp.float32)

    fwd = jax.jit(loss_func_forward)
    out_spatial, out_temporal, out_mask = jax.block_until_ready(
        fwd(denoise, reference, prevRef, prevDenoise, noise,
            traMV, occMV, preTraMV1, preOccMV1, preTraMV2, preOccMV2))

    # ---- plain-JAX reference ----
    ref_spatial = jnp.mean(jnp.abs(denoise - reference))
    ref_temporal = jnp.mean(jnp.abs((denoise - prevDenoise) - (reference - prevRef)))

    def ref_pair_mask(occ, tra, hit):
        m = jnp.where(jnp.abs(occ - tra) > 0.5, 1.0, 0.0)
        m2 = m[:, 0:1] + m[:, 1:]
        m3 = jnp.concatenate((m2, m2, m2), axis=1)
        return jnp.where(jnp.abs(m3) > 0.0, hit, 0.0)

    r_mask = (ref_pair_mask(occMV, traMV, 1.0)
              + ref_pair_mask(preOccMV1, preTraMV1, 0.8)
              + ref_pair_mask(preOccMV2, preTraMV2, 0.6))
    r_mat = jnp.abs(reference - denoise) * r_mask
    r_mat = r_mat.at[0, 0, 0, 0].set(0.0001)
    r_pos = r_mat > 0
    r_loss = jnp.sum(jnp.where(r_pos, r_mat, 0.0)) / jnp.maximum(
        jnp.sum(r_pos.astype(jnp.float32)), 1.0)
    ref_mask = jnp.where(r_loss < 0.002, jnp.float32(0.0), r_loss)

    assert jnp.allclose(out_spatial, ref_spatial, rtol=1e-5, atol=1e-6), (out_spatial, ref_spatial)
    assert jnp.allclose(out_temporal, ref_temporal, rtol=1e-5, atol=1e-6), (out_temporal, ref_temporal)
    assert jnp.allclose(out_mask, ref_mask, rtol=1e-5, atol=1e-6), (out_mask, ref_mask)

    print("KERNEL_OK")
</pallas_src>

<mosaic_0001>
module attributes {stable_mosaic.version = 11 : i64} {
  func.func @_fused_loss_kernel(%arg0: i32, %arg1: i32, %arg2: memref<1x3x2x128xf32, #tpu.memory_space<vmem>>, %arg3: memref<1x3x2x128xf32, #tpu.memory_space<vmem>>, %arg4: memref<1x3x2x128xf32, #tpu.memory_space<vmem>>, %arg5: memref<1x3x2x128xf32, #tpu.memory_space<vmem>>, %arg6: memref<1x2x2x128xf32, #tpu.memory_space<vmem>>, %arg7: memref<1x2x2x128xf32, #tpu.memory_space<vmem>>, %arg8: memref<1x2x2x128xf32, #tpu.memory_space<vmem>>, %arg9: memref<1x2x2x128xf32, #tpu.memory_space<vmem>>, %arg10: memref<1x2x2x128xf32, #tpu.memory_space<vmem>>, %arg11: memref<1x2x2x128xf32, #tpu.memory_space<vmem>>, %arg12: memref<1x1x2x128xf32, #tpu.memory_space<vmem>>, %arg13: memref<1x1x2x128xf32, #tpu.memory_space<vmem>>, %arg14: memref<1x1x2x128xf32, #tpu.memory_space<vmem>>, %arg15: memref<1x1x2x128xi32, #tpu.memory_space<vmem>>) attributes {dimension_semantics = [#tpu.dimension_semantics<parallel>, #tpu.dimension_semantics<parallel>], iteration_bounds = array<i64: 2, 1>, scalar_prefetch = 0 : i64, scratch_operands = 0 : i64, tpu.core_type = #tpu.core_type<tc>, window_params = [{transform_indices = @transform_0, window_bounds = array<i64: 1, 3, 2, 128>}, {transform_indices = @transform_1, window_bounds = array<i64: 1, 3, 2, 128>}, {transform_indices = @transform_2, window_bounds = array<i64: 1, 3, 2, 128>}, {transform_indices = @transform_3, window_bounds = array<i64: 1, 3, 2, 128>}, {transform_indices = @transform_4, window_bounds = array<i64: 1, 2, 2, 128>}, {transform_indices = @transform_5, window_bounds = array<i64: 1, 2, 2, 128>}, {transform_indices = @transform_6, window_bounds = array<i64: 1, 2, 2, 128>}, {transform_indices = @transform_7, window_bounds = array<i64: 1, 2, 2, 128>}, {transform_indices = @transform_8, window_bounds = array<i64: 1, 2, 2, 128>}, {transform_indices = @transform_9, window_bounds = array<i64: 1, 2, 2, 128>}, {transform_indices = @transform_10, window_bounds = array<i64: 1, 1, 2, 128>}, {transform_indices = @transform_11, window_bounds = array<i64: 1, 1, 2, 128>}, {transform_indices = @transform_12, window_bounds = array<i64: 1, 1, 2, 128>}, {transform_indices = @transform_13, window_bounds = array<i64: 1, 1, 2, 128>}]} {
    %c0 = arith.constant 0 : index
    %c0_0 = arith.constant 0 : index
    %c0_1 = arith.constant 0 : index
    %c0_2 = arith.constant 0 : index
    %0 = vector.load %arg2[%c0, %c0_0, %c0_1, %c0_2] : memref<1x3x2x128xf32, #tpu.memory_space<vmem>>, vector<1x3x2x128xf32>
    %1 = vector.shape_cast %0 : vector<1x3x2x128xf32> to vector<3x2x128xf32>
    %c0_3 = arith.constant 0 : index
    %c0_4 = arith.constant 0 : index
    %c0_5 = arith.constant 0 : index
    %c0_6 = arith.constant 0 : index
    %2 = vector.load %arg3[%c0_3, %c0_4, %c0_5, %c0_6] : memref<1x3x2x128xf32, #tpu.memory_space<vmem>>, vector<1x3x2x128xf32>
    %3 = vector.shape_cast %2 : vector<1x3x2x128xf32> to vector<3x2x128xf32>
    %4 = arith.subf %1, %3 : vector<3x2x128xf32>
    %5 = math.absf %4 : vector<3x2x128xf32>
    %cst = arith.constant dense<0.000000e+00> : vector<2x128xf32>
    %6 = vector.multi_reduction <add>, %5, %cst [0] : vector<3x2x128xf32> to vector<2x128xf32>
    %c0_7 = arith.constant 0 : index
    %c0_8 = arith.constant 0 : index
    %c0_9 = arith.constant 0 : index
    %c0_10 = arith.constant 0 : index
    %7 = vector.load %arg12[%c0_7, %c0_8, %c0_9, %c0_10] : memref<1x1x2x128xf32, #tpu.memory_space<vmem>>, vector<1x1x2x128xf32>
    %8 = vector.shape_cast %7 : vector<1x1x2x128xf32> to vector<2x128xf32>
    %9 = vector.shape_cast %6 : vector<2x128xf32> to vector<1x1x2x128xf32>
    tpu.vector_store %arg12[%c0_7, %c0_8, %c0_9, %c0_10], %9 {strides = array<i32>} : memref<1x1x2x128xf32, #tpu.memory_space<vmem>>, vector<1x1x2x128xf32>,
    %c0_11 = arith.constant 0 : index
    %c0_12 = arith.constant 0 : index
    %c0_13 = arith.constant 0 : index
    %c0_14 = arith.constant 0 : index
    %10 = vector.load %arg2[%c0_11, %c0_12, %c0_13, %c0_14] : memref<1x3x2x128xf32, #tpu.memory_space<vmem>>, vector<1x3x2x128xf32>
    %11 = vector.shape_cast %10 : vector<1x3x2x128xf32> to vector<3x2x128xf32>
    %c0_15 = arith.constant 0 : index
    %c0_16 = arith.constant 0 : index
    %c0_17 = arith.constant 0 : index
    %c0_18 = arith.constant 0 : index
    %12 = vector.load %arg4[%c0_15, %c0_16, %c0_17, %c0_18] : memref<1x3x2x128xf32, #tpu.memory_space<vmem>>, vector<1x3x2x128xf32>
    %13 = vector.shape_cast %12 : vector<1x3x2x128xf32> to vector<3x2x128xf32>
    %14 = arith.subf %11, %13 : vector<3x2x128xf32>
    %c0_19 = arith.constant 0 : index
    %c0_20 = arith.constant 0 : index
    %c0_21 = arith.constant 0 : index
    %c0_22 = arith.constant 0 : index
    %15 = vector.load %arg3[%c0_19, %c0_20, %c0_21, %c0_22] : memref<1x3x2x128xf32, #tpu.memory_space<vmem>>, vector<1x3x2x128xf32>
    %16 = vector.shape_cast %15 : vector<1x3x2x128xf32> to vector<3x2x128xf32>
    %c0_23 = arith.constant 0 : index
    %c0_24 = arith.constant 0 : index
    %c0_25 = arith.constant 0 : index
    %c0_26 = arith.constant 0 : index
    %17 = vector.load %arg5[%c0_23, %c0_24, %c0_25, %c0_26] : memref<1x3x2x128xf32, #tpu.memory_space<vmem>>, vector<1x3x2x128xf32>
    %18 = vector.shape_cast %17 : vector<1x3x2x128xf32> to vector<3x2x128xf32>
    %19 = arith.subf %16, %18 : vector<3x2x128xf32>
    %20 = arith.subf %14, %19 : vector<3x2x128xf32>
    %21 = math.absf %20 : vector<3x2x128xf32>
    %cst_27 = arith.constant dense<0.000000e+00> : vector<2x128xf32>
    %22 = vector.multi_reduction <add>, %21, %cst_27 [0] : vector<3x2x128xf32> to vector<2x128xf32>
    %c0_28 = arith.constant 0 : index
    %c0_29 = arith.constant 0 : index
    %c0_30 = arith.constant 0 : index
    %c0_31 = arith.constant 0 : index
    %23 = vector.load %arg13[%c0_28, %c0_29, %c0_30, %c0_31] : memref<1x1x2x128xf32, #tpu.memory_space<vmem>>, vector<1x1x2x128xf32>
    %24 = vector.shape_cast %23 : vector<1x1x2x128xf32> to vector<2x128xf32>
    %25 = vector.shape_cast %22 : vector<2x128xf32> to vector<1x1x2x128xf32>
    tpu.vector_store %arg13[%c0_28, %c0_29, %c0_30, %c0_31], %25 {strides = array<i32>} : memref<1x1x2x128xf32, #tpu.memory_space<vmem>>, vector<1x1x2x128xf32>,
    %c0_32 = arith.constant 0 : index
    %c0_33 = arith.constant 0 : index
    %c0_34 = arith.constant 0 : index
    %c0_35 = arith.constant 0 : index
    %26 = vector.load %arg7[%c0_32, %c0_33, %c0_34, %c0_35] : memref<1x2x2x128xf32, #tpu.memory_space<vmem>>, vector<1x2x2x128xf32>
    %27 = vector.shape_cast %26 : vector<1x2x2x128xf32> to vector<2x2x128xf32>
    %c0_36 = arith.constant 0 : index
    %c0_37 = arith.constant 0 : index
    %c0_38 = arith.constant 0 : index
    %c0_39 = arith.constant 0 : index
    %28 = vector.load %arg6[%c0_36, %c0_37, %c0_38, %c0_39] : memref<1x2x2x128xf32, #tpu.memory_space<vmem>>, vector<1x2x2x128xf32>
    %29 = vector.shape_cast %28 : vector<1x2x2x128xf32> to vector<2x2x128xf32>
    %30 = arith.subf %27, %29 : vector<2x2x128xf32>
    %31 = math.absf %30 : vector<2x2x128xf32>
    %cst_40 = arith.constant 5.000000e-01 : f32
    %32 = vector.broadcast %cst_40 : f32 to vector<2x2x128xf32>
    %33 = arith.cmpf ogt, %31, %32 : vector<2x2x128xf32>
    %cst_41 = arith.constant 1.000000e+00 : f32
    %cst_42 = arith.constant 0.000000e+00 : f32
    %34 = vector.broadcast %cst_41 : f32 to vector<2x2x128xf32>
    %35 = vector.broadcast %cst_42 : f32 to vector<2x2x128xf32>
    %36 = arith.select %33, %34, %35 : vector<2x2x128xi1>, vector<2x2x128xf32>
    %37 = vector.extract_strided_slice %36 {offsets = [0, 0, 0], sizes = [1, 2, 128], strides = [1, 1, 1]} : vector<2x2x128xf32> to vector<1x2x128xf32>
    %38 = vector.shape_cast %37 : vector<1x2x128xf32> to vector<2x128xf32>
    %39 = vector.extract_strided_slice %36 {offsets = [1, 0, 0], sizes = [1, 2, 128], strides = [1, 1, 1]} : vector<2x2x128xf32> to vector<1x2x128xf32>
    %40 = vector.shape_cast %39 : vector<1x2x128xf32> to vector<2x128xf32>
    %41 = arith.addf %38, %40 : vector<2x128xf32>
    %cst_43 = arith.constant 0.000000e+00 : f32
    %42 = vector.broadcast %cst_43 : f32 to vector<2x128xf32>
    %43 = arith.cmpf ogt, %41, %42 : vector<2x128xf32>
    %cst_44 = arith.constant 1.000000e+00 : f32
    %cst_45 = arith.constant 0.000000e+00 : f32
    %44 = vector.broadcast %cst_44 : f32 to vector<2x128xf32>
    %45 = vector.broadcast %cst_45 : f32 to vector<2x128xf32>
    %46 = arith.select %43, %44, %45 : vector<2x128xi1>, vector<2x128xf32>
    %c0_46 = arith.constant 0 : index
    %c0_47 = arith.constant 0 : index
    %c0_48 = arith.constant 0 : index
    %c0_49 = arith.constant 0 : index
    %47 = vector.load %arg9[%c0_46, %c0_47, %c0_48, %c0_49] : memref<1x2x2x128xf32, #tpu.memory_space<vmem>>, vector<1x2x2x128xf32>
    %48 = vector.shape_cast %47 : vector<1x2x2x128xf32> to vector<2x2x128xf32>
    %c0_50 = arith.constant 0 : index
    %c0_51 = arith.constant 0 : index
    %c0_52 = arith.constant 0 : index
    %c0_53 = arith.constant 0 : index
    %49 = vector.load %arg8[%c0_50, %c0_51, %c0_52, %c0_53] : memref<1x2x2x128xf32, #tpu.memory_space<vmem>>, vector<1x2x2x128xf32>
    %50 = vector.shape_cast %49 : vector<1x2x2x128xf32> to vector<2x2x128xf32>
    %51 = arith.subf %48, %50 : vector<2x2x128xf32>
    %52 = math.absf %51 : vector<2x2x128xf32>
    %cst_54 = arith.constant 5.000000e-01 : f32
    %53 = vector.broadcast %cst_54 : f32 to vector<2x2x128xf32>
    %54 = arith.cmpf ogt, %52, %53 : vector<2x2x128xf32>
    %cst_55 = arith.constant 1.000000e+00 : f32
    %cst_56 = arith.constant 0.000000e+00 : f32
    %55 = vector.broadcast %cst_55 : f32 to vector<2x2x128xf32>
    %56 = vector.broadcast %cst_56 : f32 to vector<2x2x128xf32>
    %57 = arith.select %54, %55, %56 : vector<2x2x128xi1>, vector<2x2x128xf32>
    %58 = vector.extract_strided_slice %57 {offsets = [0, 0, 0], sizes = [1, 2, 128], strides = [1, 1, 1]} : vector<2x2x128xf32> to vector<1x2x128xf32>
    %59 = vector.shape_cast %58 : vector<1x2x128xf32> to vector<2x128xf32>
    %60 = vector.extract_strided_slice %57 {offsets = [1, 0, 0], sizes = [1, 2, 128], strides = [1, 1, 1]} : vector<2x2x128xf32> to vector<1x2x128xf32>
    %61 = vector.shape_cast %60 : vector<1x2x128xf32> to vector<2x128xf32>
    %62 = arith.addf %59, %61 : vector<2x128xf32>
    %cst_57 = arith.constant 0.000000e+00 : f32
    %63 = vector.broadcast %cst_57 : f32 to vector<2x128xf32>
    %64 = arith.cmpf ogt, %62, %63 : vector<2x128xf32>
    %cst_58 = arith.constant 8.000000e-01 : f32
    %cst_59 = arith.constant 0.000000e+00 : f32
    %65 = vector.broadcast %cst_58 : f32 to vector<2x128xf32>
    %66 = vector.broadcast %cst_59 : f32 to vector<2x128xf32>
    %67 = arith.select %64, %65, %66 : vector<2x128xi1>, vector<2x128xf32>
    %68 = arith.addf %46, %67 : vector<2x128xf32>
    %c0_60 = arith.constant 0 : index
    %c0_61 = arith.constant 0 : index
    %c0_62 = arith.constant 0 : index
    %c0_63 = arith.constant 0 : index
    %69 = vector.load %arg11[%c0_60, %c0_61, %c0_62, %c0_63] : memref<1x2x2x128xf32, #tpu.memory_space<vmem>>, vector<1x2x2x128xf32>
    %70 = vector.shape_cast %69 : vector<1x2x2x128xf32> to vector<2x2x128xf32>
    %c0_64 = arith.constant 0 : index
    %c0_65 = arith.constant 0 : index
    %c0_66 = arith.constant 0 : index
    %c0_67 = arith.constant 0 : index
    %71 = vector.load %arg10[%c0_64, %c0_65, %c0_66, %c0_67] : memref<1x2x2x128xf32, #tpu.memory_space<vmem>>, vector<1x2x2x128xf32>
    %72 = vector.shape_cast %71 : vector<1x2x2x128xf32> to vector<2x2x128xf32>
    %73 = arith.subf %70, %72 : vector<2x2x128xf32>
    %74 = math.absf %73 : vector<2x2x128xf32>
    %cst_68 = arith.constant 5.000000e-01 : f32
    %75 = vector.broadcast %cst_68 : f32 to vector<2x2x128xf32>
    %76 = arith.cmpf ogt, %74, %75 : vector<2x2x128xf32>
    %cst_69 = arith.constant 1.000000e+00 : f32
    %cst_70 = arith.constant 0.000000e+00 : f32
    %77 = vector.broadcast %cst_69 : f32 to vector<2x2x128xf32>
    %78 = vector.broadcast %cst_70 : f32 to vector<2x2x128xf32>
    %79 = arith.select %76, %77, %78 : vector<2x2x128xi1>, vector<2x2x128xf32>
    %80 = vector.extract_strided_slice %79 {offsets = [0, 0, 0], sizes = [1, 2, 128], strides = [1, 1, 1]} : vector<2x2x128xf32> to vector<1x2x128xf32>
    %81 = vector.shape_cast %80 : vector<1x2x128xf32> to vector<2x128xf32>
    %82 = vector.extract_strided_slice %79 {offsets = [1, 0, 0], sizes = [1, 2, 128], strides = [1, 1, 1]} : vector<2x2x128xf32> to vector<1x2x128xf32>
    %83 = vector.shape_cast %82 : vector<1x2x128xf32> to vector<2x128xf32>
    %84 = arith.addf %81, %83 : vector<2x128xf32>
    %cst_71 = arith.constant 0.000000e+00 : f32
    %85 = vector.broadcast %cst_71 : f32 to vector<2x128xf32>
    %86 = arith.cmpf ogt, %84, %85 : vector<2x128xf32>
    %cst_72 = arith.constant 6.000000e-01 : f32
    %cst_73 = arith.constant 0.000000e+00 : f32
    %87 = vector.broadcast %cst_72 : f32 to vector<2x128xf32>
    %88 = vector.broadcast %cst_73 : f32 to vector<2x128xf32>
    %89 = arith.select %86, %87, %88 : vector<2x128xi1>, vector<2x128xf32>
    %90 = arith.addf %68, %89 : vector<2x128xf32>
    %c0_74 = arith.constant 0 : index
    %c0_75 = arith.constant 0 : index
    %c0_76 = arith.constant 0 : index
    %c0_77 = arith.constant 0 : index
    %91 = vector.load %arg2[%c0_74, %c0_75, %c0_76, %c0_77] : memref<1x3x2x128xf32, #tpu.memory_space<vmem>>, vector<1x3x2x128xf32>
    %92 = vector.shape_cast %91 : vector<1x3x2x128xf32> to vector<3x2x128xf32>
    %c0_78 = arith.constant 0 : index
    %c0_79 = arith.constant 0 : index
    %c0_80 = arith.constant 0 : index
    %c0_81 = arith.constant 0 : index
    %93 = vector.load %arg3[%c0_78, %c0_79, %c0_80, %c0_81] : memref<1x3x2x128xf32, #tpu.memory_space<vmem>>, vector<1x3x2x128xf32>
    %94 = vector.shape_cast %93 : vector<1x3x2x128xf32> to vector<3x2x128xf32>
    %95 = arith.subf %92, %94 : vector<3x2x128xf32>
    %96 = math.absf %95 : vector<3x2x128xf32>
    %97 = vector.shape_cast %90 : vector<2x128xf32> to vector<1x2x128xf32>
    %98 = vector.broadcast %97 : vector<1x2x128xf32> to vector<3x2x128xf32>
    %99 = arith.mulf %96, %98 : vector<3x2x128xf32>
    %cst_82 = arith.constant 0.000000e+00 : f32
    %100 = vector.broadcast %cst_82 : f32 to vector<3x2x128xf32>
    %101 = arith.cmpf ogt, %99, %100 : vector<3x2x128xf32>
    %cst_83 = arith.constant 0.000000e+00 : f32
    %102 = vector.broadcast %cst_83 : f32 to vector<3x2x128xf32>
    %103 = arith.select %101, %99, %102 : vector<3x2x128xi1>, vector<3x2x128xf32>
    %cst_84 = arith.constant dense<0.000000e+00> : vector<2x128xf32>
    %104 = vector.multi_reduction <add>, %103, %cst_84 [0] : vector<3x2x128xf32> to vector<2x128xf32>
    %c0_85 = arith.constant 0 : index
    %c0_86 = arith.constant 0 : index
    %c0_87 = arith.constant 0 : index
    %c0_88 = arith.constant 0 : index
    %105 = vector.load %arg14[%c0_85, %c0_86, %c0_87, %c0_88] : memref<1x1x2x128xf32, #tpu.memory_space<vmem>>, vector<1x1x2x128xf32>
    %106 = vector.shape_cast %105 : vector<1x1x2x128xf32> to vector<2x128xf32>
    %107 = vector.shape_cast %104 : vector<2x128xf32> to vector<1x1x2x128xf32>
    tpu.vector_store %arg14[%c0_85, %c0_86, %c0_87, %c0_88], %107 {strides = array<i32>} : memref<1x1x2x128xf32, #tpu.memory_space<vmem>>, vector<1x1x2x128xf32>,
    %108 = arith.extui %101 : vector<3x2x128xi1> to vector<3x2x128xi32>
    %cst_89 = arith.constant dense<0> : vector<2x128xi32>
    %109 = vector.multi_reduction <add>, %108, %cst_89 [0] : vector<3x2x128xi32> to vector<2x128xi32>
    %c0_90 = arith.constant 0 : index
    %c0_91 = arith.constant 0 : index
    %c0_92 = arith.constant 0 : index
    %c0_93 = arith.constant 0 : index
    %110 = vector.load %arg15[%c0_90, %c0_91, %c0_92, %c0_93] : memref<1x1x2x128xi32, #tpu.memory_space<vmem>>, vector<1x1x2x128xi32>
    %111 = vector.shape_cast %110 : vector<1x1x2x128xi32> to vector<2x128xi32>
    %112 = vector.shape_cast %109 : vector<2x128xi32> to vector<1x1x2x128xi32>
    tpu.vector_store %arg15[%c0_90, %c0_91, %c0_92, %c0_93], %112 {strides = array<i32>} : memref<1x1x2x128xi32, #tpu.memory_space<vmem>>, vector<1x1x2x128xi32>,
    return
  }
  func.func @transform_0(%arg0: i32, %arg1: i32) -> (i32, i32, i32, i32) {
    %c0_i32 = arith.constant 0 : i32
    %c0_i32_0 = arith.constant 0 : i32
    %c0_i32_1 = arith.constant 0 : i32
    return %arg0, %c0_i32, %arg1, %c0_i32_0 : i32, i32, i32, i32
  }
  func.func @transform_1(%arg0: i32, %arg1: i32) -> (i32, i32, i32, i32) {
    %c0_i32 = arith.constant 0 : i32
    %c0_i32_0 = arith.constant 0 : i32
    %c0_i32_1 = arith.constant 0 : i32
    return %arg0, %c0_i32, %arg1, %c0_i32_0 : i32, i32, i32, i32
  }
  func.func @transform_2(%arg0: i32, %arg1: i32) -> (i32, i32, i32, i32) {
    %c0_i32 = arith.constant 0 : i32
    %c0_i32_0 = arith.constant 0 : i32
    %c0_i32_1 = arith.constant 0 : i32
    return %arg0, %c0_i32, %arg1, %c0_i32_0 : i32, i32, i32, i32
  }
  func.func @transform_3(%arg0: i32, %arg1: i32) -> (i32, i32, i32, i32) {
    %c0_i32 = arith.constant 0 : i32
    %c0_i32_0 = arith.constant 0 : i32
    %c0_i32_1 = arith.constant 0 : i32
    return %arg0, %c0_i32, %arg1, %c0_i32_0 : i32, i32, i32, i32
  }
  func.func @transform_4(%arg0: i32, %arg1: i32) -> (i32, i32, i32, i32) {
    %c0_i32 = arith.constant 0 : i32
    %c0_i32_0 = arith.constant 0 : i32
    %c0_i32_1 = arith.constant 0 : i32
    return %arg0, %c0_i32, %arg1, %c0_i32_0 : i32, i32, i32, i32
  }
  func.func @transform_5(%arg0: i32, %arg1: i32) -> (i32, i32, i32, i32) {
    %c0_i32 = arith.constant 0 : i32
    %c0_i32_0 = arith.constant 0 : i32
    %c0_i32_1 = arith.constant 0 : i32
    return %arg0, %c0_i32, %arg1, %c0_i32_0 : i32, i32, i32, i32
  }
  func.func @transform_6(%arg0: i32, %arg1: i32) -> (i32, i32, i32, i32) {
    %c0_i32 = arith.constant 0 : i32
    %c0_i32_0 = arith.constant 0 : i32
    %c0_i32_1 = arith.constant 0 : i32
    return %arg0, %c0_i32, %arg1, %c0_i32_0 : i32, i32, i32, i32
  }
  func.func @transform_7(%arg0: i32, %arg1: i32) -> (i32, i32, i32, i32) {
    %c0_i32 = arith.constant 0 : i32
    %c0_i32_0 = arith.constant 0 : i32
    %c0_i32_1 = arith.constant 0 : i32
    return %arg0, %c0_i32, %arg1, %c0_i32_0 : i32, i32, i32, i32
  }
  func.func @transform_8(%arg0: i32, %arg1: i32) -> (i32, i32, i32, i32) {
    %c0_i32 = arith.constant 0 : i32
    %c0_i32_0 = arith.constant 0 : i32
    %c0_i32_1 = arith.constant 0 : i32
    return %arg0, %c0_i32, %arg1, %c0_i32_0 : i32, i32, i32, i32
  }
  func.func @transform_9(%arg0: i32, %arg1: i32) -> (i32, i32, i32, i32) {
    %c0_i32 = arith.constant 0 : i32
    %c0_i32_0 = arith.constant 0 : i32
    %c0_i32_1 = arith.constant 0 : i32
    return %arg0, %c0_i32, %arg1, %c0_i32_0 : i32, i32, i32, i32
  }
  func.func @transform_10(%arg0: i32, %arg1: i32) -> (i32, i32, i32, i32) {
    %c0_i32 = arith.constant 0 : i32
    %c0_i32_0 = arith.constant 0 : i32
    %c0_i32_1 = arith.constant 0 : i32
    return %arg0, %arg1, %c0_i32, %c0_i32_0 : i32, i32, i32, i32
  }
  func.func @transform_11(%arg0: i32, %arg1: i32) -> (i32, i32, i32, i32) {
    %c0_i32 = arith.constant 0 : i32
    %c0_i32_0 = arith.constant 0 : i32
    %c0_i32_1 = arith.constant 0 : i32
    return %arg0, %arg1, %c0_i32, %c0_i32_0 : i32, i32, i32, i32
  }
  func.func @transform_12(%arg0: i32, %arg1: i32) -> (i32, i32, i32, i32) {
    %c0_i32 = arith.constant 0 : i32
    %c0_i32_0 = arith.constant 0 : i32
    %c0_i32_1 = arith.constant 0 : i32
    return %arg0, %arg1, %c0_i32, %c0_i32_0 : i32, i32, i32, i32
  }
  func.func @transform_13(%arg0: i32, %arg1: i32) -> (i32, i32, i32, i32) {
    %c0_i32 = arith.constant 0 : i32
    %c0_i32_0 = arith.constant 0 : i32
    %c0_i32_1 = arith.constant 0 : i32
    return %arg0, %arg1, %c0_i32, %c0_i32_0 : i32, i32, i32, i32
  }
}

</mosaic_0001>

<llo_original>
// kernel: loss_func_forward.1
$region0: #{loss_func_forward.1}
  #allocation0 [shape = 'u32[]', space=smem, size = 0x4, offset = 0x4, fixed_abs, tag = 'smem constant byte address 0x4 - core index']
  #allocation1 [shape = 'u32[144,128]{1,0:T(1,128)}', space=vmem, size = 0x12000, scoped, tag = 'internal scratch']
  %s0 = inlined_call_operand.vmem [shape: f32[2,3,2,128], index: 0, kind: input, shape index: {}]
  %s1 = inlined_call_operand.vmem [shape: f32[2,3,2,128], index: 1, kind: input, shape index: {}]
  %s2 = inlined_call_operand.vmem [shape: f32[2,3,2,128], index: 2, kind: input, shape index: {}]
  %s3 = inlined_call_operand.vmem [shape: f32[2,3,2,128], index: 3, kind: input, shape index: {}]
  %s4 = inlined_call_operand.vmem [shape: f32[2,2,2,128], index: 4, kind: input, shape index: {}]
  %s5 = inlined_call_operand.vmem [shape: f32[2,2,2,128], index: 5, kind: input, shape index: {}]
  %s6 = inlined_call_operand.vmem [shape: f32[2,2,2,128], index: 6, kind: input, shape index: {}]
  %s7 = inlined_call_operand.vmem [shape: f32[2,2,2,128], index: 7, kind: input, shape index: {}]
  %s8 = inlined_call_operand.vmem [shape: f32[2,2,2,128], index: 8, kind: input, shape index: {}]
  %s9 = inlined_call_operand.vmem [shape: f32[2,2,2,128], index: 9, kind: input, shape index: {}]
  %s10 = inlined_call_operand.vmem [shape: f32[2,1,2,128], index: 10, kind: output, shape index: {0}]
  %s11 = inlined_call_operand.vmem [shape: f32[2,1,2,128], index: 11, kind: output, shape index: {1}]
  %s12 = inlined_call_operand.vmem [shape: f32[2,1,2,128], index: 12, kind: output, shape index: {2}]
  %s13 = inlined_call_operand.vmem [shape: s32[2,1,2,128], index: 13, kind: output, shape index: {3}]
  %14 = xla_tuple %s10, %s11, %s12, %s13
  %s15 = sld [smem:[#allocation0]]
  $region97: #{loss_func_forward.1} parent=0
    _
  %s17 = ssub.s32 1, %s15
  %s18 = scalar_select 0, %s17, %s15
  loop: start=0, step=1, limit=4
  $region2: #{loss_func_forward.1} parent=0 // loop_pre_header
    _
  $region3: #{loss_func_forward.1} parent=0 // loop_header
    %s20 = sphi 0, %s24
    %p21 = scmp.ge.s32.totalorder %s20, 4
    %s27 = sphi 0, %s39
    %s28 = sphi 0, %s35
    %s29 = sphi 0, %s27
    %s30 = sphi 0, %s28
    %s31 = sphi 0, %s29
    %s32 = sphi 0, %s30
    %s44 = sphi 0, %s46
    %s47 = sphi 0, %s44
    %s48 = sphi 0, %s47
    %s64 = sphi 0, %s48
    %s72 = sphi 0, %s74
    %s75 = sphi 0, %s72
    %s76 = sphi 0, %s75
    %s92 = sphi 0, %s76
    %s100 = sphi 0, %s102
    %s103 = sphi 0, %s100
    %s104 = sphi 0, %s103
    %s120 = sphi 0, %s104
    %s128 = sphi 0, %s130
    %s131 = sphi 0, %s128
    %s132 = sphi 0, %s131
    %s148 = sphi 0, %s132
    %s156 = sphi 0, %s158
    %s159 = sphi 0, %s156
    %s160 = sphi 0, %s159
    %s176 = sphi 0, %s160
    %s184 = sphi 0, %s186
    %s187 = sphi 0, %s184
    %s188 = sphi 0, %s187
    %s204 = sphi 0, %s188
    %s212 = sphi 0, %s214
    %s215 = sphi 0, %s212
    %s216 = sphi 0, %s215
    %s232 = sphi 0, %s216
    %s240 = sphi 0, %s242
    %s243 = sphi 0, %s240
    %s244 = sphi 0, %s243
    %s260 = sphi 0, %s244
    %s268 = sphi 0, %s270
    %s271 = sphi 0, %s268
    %s272 = sphi 0, %s271
    %s288 = sphi 0, %s272
    %s296 = sphi 0, %s298
    %s299 = sphi 0, %s296
    %s300 = sphi 0, %s299
    %s316 = sphi 0, %s300
    %s324 = sphi 0, %s326
    %s327 = sphi 0, %s324
    %s328 = sphi 0, %s327
    %s344 = sphi 0, %s328
    %s352 = sphi 0, %s354
    %s355 = sphi 0, %s352
    %s356 = sphi 0, %s355
    %s372 = sphi 0, %s356
    %s380 = sphi 0, %s382
    %s383 = sphi 0, %s380
    %s384 = sphi 0, %s383
    %s400 = sphi 0, %s384
    %s408 = sphi 0, %s410
    %s411 = sphi 0, %s408
    %s412 = sphi 0, %s411
    %s428 = sphi 0, %s412
  $region4: #{loss_func_forward.1} parent=0 // loop_header_branch
    %23 = sbr.rel (%p21) target = $region8
  $region5: #{loss_func_forward.1} parent=0 // loop_body
    %s25 = ssub.s32 %s20, 1
    %s26 = ssub.s32 %s20, 2
    %s33 = sadd.s32 1, %s28
    %p34 = scmp.ge.s32.totalorder %s33, 1
    %s35 = scalar_select %p34, 0, %s33
    %s36 = sadd.s32 1, %s27
    %s37 = scalar_select %p34, %s36, %s27
    %p38 = scmp.ge.s32.totalorder %s37, 2
    %s39 = scalar_select %p38, 0, %s37
    %s40 = ssub.s32 %s27, %s39
    %s41 = ssub.s32 %s28, %s35
    %s42 = sor.u32 %s40, %s41
    %p43 = scmp.eq.s32.totalorder %s42, 0
    %s45 = sadd.s32 %s44, 1
    %s46 = scalar_select %p43, %s44, %s45
    %p49 = pneg %p43
    %p50 = scmp.eq.s32.totalorder %s20, 1
    %p51 = por %p49, %p50
    %p52 = scmp.ne.s32.totalorder %s44, %s47
    %p53 = scmp.eq.s32.totalorder %s20, 0
    %p54 = por %p52, %p53
    %p55 = scmp.ne.s32.totalorder %s44, %s47
    %p56 = scmp.eq.s32.totalorder %s25, 1
    %p57 = por %p55, %p56
    %p58 = scmp.ne.s32.totalorder %s47, %s48
    %p59 = scmp.eq.s32.totalorder %s25, 0
    %p60 = por %p58, %p59
    %p61 = scmp.ne.s32.totalorder %s47, %s48
    %p62 = scmp.eq.s32.totalorder %s26, 1
    %p63 = por %p61, %p62
    %p65 = scmp.ne.s32.totalorder %s48, %s64
    %p66 = scmp.eq.s32.totalorder %s26, 0
    %p67 = por %p65, %p66
    %s68 = ssub.s32 %s27, %s39
    %s69 = ssub.s32 %s28, %s35
    %s70 = sor.u32 %s68, %s69
    %p71 = scmp.eq.s32.totalorder %s70, 0
    %s73 = sadd.s32 %s72, 1
    %s74 = scalar_select %p71, %s72, %s73
    %p77 = pneg %p71
    %p78 = scmp.eq.s32.totalorder %s20, 1
    %p79 = por %p77, %p78
    %p80 = scmp.ne.s32.totalorder %s72, %s75
    %p81 = scmp.eq.s32.totalorder %s20, 0
    %p82 = por %p80, %p81
    %p83 = scmp.ne.s32.totalorder %s72, %s75
    %p84 = scmp.eq.s32.totalorder %s25, 1
    %p85 = por %p83, %p84
    %p86 = scmp.ne.s32.totalorder %s75, %s76
    %p87 = scmp.eq.s32.totalorder %s25, 0
    %p88 = por %p86, %p87
    %p89 = scmp.ne.s32.totalorder %s75, %s76
    %p90 = scmp.eq.s32.totalorder %s26, 1
    %p91 = por %p89, %p90
    %p93 = scmp.ne.s32.totalorder %s76, %s92
    %p94 = scmp.eq.s32.totalorder %s26, 0
    %p95 = por %p93, %p94
    %s96 = ssub.s32 %s27, %s39
    %s97 = ssub.s32 %s28, %s35
    %s98 = sor.u32 %s96, %s97
    %p99 = scmp.eq.s32.totalorder %s98, 0
    %s101 = sadd.s32 %s100, 1
    %s102 = scalar_select %p99, %s100, %s101
    %p105 = pneg %p99
    %p106 = scmp.eq.s32.totalorder %s20, 1
    %p107 = por %p105, %p106
    %p108 = scmp.ne.s32.totalorder %s100, %s103
    %p109 = scmp.eq.s32.totalorder %s20, 0
    %p110 = por %p108, %p109
    %p111 = scmp.ne.s32.totalorder %s100, %s103
    %p112 = scmp.eq.s32.totalorder %s25, 1
    %p113 = por %p111, %p112
    %p114 = scmp.ne.s32.totalorder %s103, %s104
    %p115 = scmp.eq.s32.totalorder %s25, 0
    %p116 = por %p114, %p115
    %p117 = scmp.ne.s32.totalorder %s103, %s104
    %p118 = scmp.eq.s32.totalorder %s26, 1
    %p119 = por %p117, %p118
    %p121 = scmp.ne.s32.totalorder %s104, %s120
    %p122 = scmp.eq.s32.totalorder %s26, 0
    %p123 = por %p121, %p122
    %s124 = ssub.s32 %s27, %s39
    %s125 = ssub.s32 %s28, %s35
    %s126 = sor.u32 %s124, %s125
    %p127 = scmp.eq.s32.totalorder %s126, 0
    %s129 = sadd.s32 %s128, 1
    %s130 = scalar_select %p127, %s128, %s129
    %p133 = pneg %p127
    %p134 = scmp.eq.s32.totalorder %s20, 1
    %p135 = por %p133, %p134
    %p136 = scmp.ne.s32.totalorder %s128, %s131
    %p137 = scmp.eq.s32.totalorder %s20, 0
    %p138 = por %p136, %p137
    %p139 = scmp.ne.s32.totalorder %s128, %s131
    %p140 = scmp.eq.s32.totalorder %s25, 1
    %p141 = por %p139, %p140
    %p142 = scmp.ne.s32.totalorder %s131, %s132
    %p143 = scmp.eq.s32.totalorder %s25, 0
    %p144 = por %p142, %p143
    %p145 = scmp.ne.s32.totalorder %s131, %s132
    %p146 = scmp.eq.s32.totalorder %s26, 1
    %p147 = por %p145, %p146
    %p149 = scmp.ne.s32.totalorder %s132, %s148
    %p150 = scmp.eq.s32.totalorder %s26, 0
    %p151 = por %p149, %p150
    %s152 = ssub.s32 %s27, %s39
    %s153 = ssub.s32 %s28, %s35
    %s154 = sor.u32 %s152, %s153
    %p155 = scmp.eq.s32.totalorder %s154, 0
    %s157 = sadd.s32 %s156, 1
    %s158 = scalar_select %p155, %s156, %s157
    %p161 = pneg %p155
    %p162 = scmp.eq.s32.totalorder %s20, 1
    %p163 = por %p161, %p162
    %p164 = scmp.ne.s32.totalorder %s156, %s159
    %p165 = scmp.eq.s32.totalorder %s20, 0
    %p166 = por %p164, %p165
    %p167 = scmp.ne.s32.totalorder %s156, %s159
    %p168 = scmp.eq.s32.totalorder %s25, 1
    %p169 = por %p167, %p168
    %p170 = scmp.ne.s32.totalorder %s159, %s160
    %p171 = scmp.eq.s32.totalorder %s25, 0
    %p172 = por %p170, %p171
    %p173 = scmp.ne.s32.totalorder %s159, %s160
    %p174 = scmp.eq.s32.totalorder %s26, 1
    %p175 = por %p173, %p174
    %p177 = scmp.ne.s32.totalorder %s160, %s176
    %p178 = scmp.eq.s32.totalorder %s26, 0
    %p179 = por %p177, %p178
    %s180 = ssub.s32 %s27, %s39
    %s181 = ssub.s32 %s28, %s35
    %s182 = sor.u32 %s180, %s181
    %p183 = scmp.eq.s32.totalorder %s182, 0
    %s185 = sadd.s32 %s184, 1
    %s186 = scalar_select %p183, %s184, %s185
    %p189 = pneg %p183
    %p190 = scmp.eq.s32.totalorder %s20, 1
    %p191 = por %p189, %p190
    %p192 = scmp.ne.s32.totalorder %s184, %s187
    %p193 = scmp.eq.s32.totalorder %s20, 0
    %p194 = por %p192, %p193
    %p195 = scmp.ne.s32.totalorder %s184, %s187
    %p196 = scmp.eq.s32.totalorder %s25, 1
    %p197 = por %p195, %p196
    %p198 = scmp.ne.s32.totalorder %s187, %s188
    %p199 = scmp.eq.s32.totalorder %s25, 0
    %p200 = por %p198, %p199
    %p201 = scmp.ne.s32.totalorder %s187, %s188
    %p202 = scmp.eq.s32.totalorder %s26, 1
    %p203 = por %p201, %p202
    %p205 = scmp.ne.s32.totalorder %s188, %s204
    %p206 = scmp.eq.s32.totalorder %s26, 0
    %p207 = por %p205, %p206
    %s208 = ssub.s32 %s27, %s39
    %s209 = ssub.s32 %s28, %s35
    %s210 = sor.u32 %s208, %s209
    %p211 = scmp.eq.s32.totalorder %s210, 0
    %s213 = sadd.s32 %s212, 1
    %s214 = scalar_select %p211, %s212, %s213
    %p217 = pneg %p211
    %p218 = scmp.eq.s32.totalorder %s20, 1
    %p219 = por %p217, %p218
    %p220 = scmp.ne.s32.totalorder %s212, %s215
    %p221 = scmp.eq.s32.totalorder %s20, 0
    %p222 = por %p220, %p221
    %p223 = scmp.ne.s32.totalorder %s212, %s215
    %p224 = scmp.eq.s32.totalorder %s25, 1
    %p225 = por %p223, %p224
    %p226 = scmp.ne.s32.totalorder %s215, %s216
    %p227 = scmp.eq.s32.totalorder %s25, 0
    %p228 = por %p226, %p227
    %p229 = scmp.ne.s32.totalorder %s215, %s216
    %p230 = scmp.eq.s32.totalorder %s26, 1
    %p231 = por %p229, %p230
    %p233 = scmp.ne.s32.totalorder %s216, %s232
    %p234 = scmp.eq.s32.totalorder %s26, 0
    %p235 = por %p233, %p234
    %s236 = ssub.s32 %s27, %s39
    %s237 = ssub.s32 %s28, %s35
    %s238 = sor.u32 %s236, %s237
    %p239 = scmp.eq.s32.totalorder %s238, 0
    %s241 = sadd.s32 %s240, 1
    %s242 = scalar_select %p239, %s240, %s241
    %p245 = pneg %p239
    %p246 = scmp.eq.s32.totalorder %s20, 1
    %p247 = por %p245, %p246
    %p248 = scmp.ne.s32.totalorder %s240, %s243
    %p249 = scmp.eq.s32.totalorder %s20, 0
    %p250 = por %p248, %p249
    %p251 = scmp.ne.s32.totalorder %s240, %s243
    %p252 = scmp.eq.s32.totalorder %s25, 1
    %p253 = por %p251, %p252
    %p254 = scmp.ne.s32.totalorder %s243, %s244
    %p255 = scmp.eq.s32.totalorder %s25, 0
    %p256 = por %p254, %p255
    %p257 = scmp.ne.s32.totalorder %s243, %s244
    %p258 = scmp.eq.s32.totalorder %s26, 1
    %p259 = por %p257, %p258
    %p261 = scmp.ne.s32.totalorder %s244, %s260
    %p262 = scmp.eq.s32.totalorder %s26, 0
    %p263 = por %p261, %p262
    %s264 = ssub.s32 %s27, %s39
    %s265 = ssub.s32 %s28, %s35
    %s266 = sor.u32 %s264, %s265
    %p267 = scmp.eq.s32.totalorder %s266, 0
    %s269 = sadd.s32 %s268, 1
    %s270 = scalar_select %p267, %s268, %s269
    %p273 = pneg %p267
    %p274 = scmp.eq.s32.totalorder %s20, 1
    %p275 = por %p273, %p274
    %p276 = scmp.ne.s32.totalorder %s268, %s271
    %p277 = scmp.eq.s32.totalorder %s20, 0
    %p278 = por %p276, %p277
    %p279 = scmp.ne.s32.totalorder %s268, %s271
    %p280 = scmp.eq.s32.totalorder %s25, 1
    %p281 = por %p279, %p280
    %p282 = scmp.ne.s32.totalorder %s271, %s272
    %p283 = scmp.eq.s32.totalorder %s25, 0
    %p284 = por %p282, %p283
    %p285 = scmp.ne.s32.totalorder %s271, %s272
    %p286 = scmp.eq.s32.totalorder %s26, 1
    %p287 = por %p285, %p286
    %p289 = scmp.ne.s32.totalorder %s272, %s288
    %p290 = scmp.eq.s32.totalorder %s26, 0
    %p291 = por %p289, %p290
    %s292 = ssub.s32 %s27, %s39
    %s293 = ssub.s32 %s28, %s35
    %s294 = sor.u32 %s292, %s293
    %p295 = scmp.eq.s32.totalorder %s294, 0
    %s297 = sadd.s32 %s296, 1
    %s298 = scalar_select %p295, %s296, %s297
    %p301 = pneg %p295
    %p302 = scmp.eq.s32.totalorder %s20, 1
    %p303 = por %p301, %p302
    %p304 = scmp.ne.s32.totalorder %s296, %s299
    %p305 = scmp.eq.s32.totalorder %s20, 0
    %p306 = por %p304, %p305
    %p307 = scmp.ne.s32.totalorder %s296, %s299
    %p308 = scmp.eq.s32.totalorder %s25, 1
    %p309 = por %p307, %p308
    %p310 = scmp.ne.s32.totalorder %s299, %s300
    %p311 = scmp.eq.s32.totalorder %s25, 0
    %p312 = por %p310, %p311
    %p313 = scmp.ne.s32.totalorder %s299, %s300
    %p314 = scmp.eq.s32.totalorder %s26, 1
    %p315 = por %p313, %p314
    %p317 = scmp.ne.s32.totalorder %s300, %s316
    %p318 = scmp.eq.s32.totalorder %s26, 0
    %p319 = por %p317, %p318
    %s320 = ssub.s32 %s27, %s39
    %s321 = ssub.s32 %s28, %s35
    %s322 = sor.u32 %s320, %s321
    %p323 = scmp.eq.s32.totalorder %s322, 0
    %s325 = sadd.s32 %s324, 1
    %s326 = scalar_select %p323, %s324, %s325
    %p329 = pneg %p323
    %p330 = scmp.eq.s32.totalorder %s20, 1
    %p331 = por %p329, %p330
    %p332 = scmp.ne.s32.totalorder %s324, %s327
    %p333 = scmp.eq.s32.totalorder %s20, 0
    %p334 = por %p332, %p333
    %p335 = scmp.ne.s32.totalorder %s324, %s327
    %p336 = scmp.eq.s32.totalorder %s25, 1
    %p337 = por %p335, %p336
    %p338 = scmp.ne.s32.totalorder %s327, %s328
    %p339 = scmp.eq.s32.totalorder %s25, 0
    %p340 = por %p338, %p339
    %p341 = scmp.ne.s32.totalorder %s327, %s328
    %p342 = scmp.eq.s32.totalorder %s26, 1
    %p343 = por %p341, %p342
    %p345 = scmp.ne.s32.totalorder %s328, %s344
    %p346 = scmp.eq.s32.totalorder %s26, 0
    %p347 = por %p345, %p346
    %s348 = ssub.s32 %s27, %s39
    %s349 = ssub.s32 %s28, %s35
    %s350 = sor.u32 %s348, %s349
    %p351 = scmp.eq.s32.totalorder %s350, 0
    %s353 = sadd.s32 %s352, 1
    %s354 = scalar_select %p351, %s352, %s353
    %p357 = pneg %p351
    %p358 = scmp.eq.s32.totalorder %s20, 1
    %p359 = por %p357, %p358
    %p360 = scmp.ne.s32.totalorder %s352, %s355
    %p361 = scmp.eq.s32.totalorder %s20, 0
    %p362 = por %p360, %p361
    %p363 = scmp.ne.s32.totalorder %s352, %s355
    %p364 = scmp.eq.s32.totalorder %s25, 1
    %p365 = por %p363, %p364
    %p366 = scmp.ne.s32.totalorder %s355, %s356
    %p367 = scmp.eq.s32.totalorder %s25, 0
    %p368 = por %p366, %p367
    %p369 = scmp.ne.s32.totalorder %s355, %s356
    %p370 = scmp.eq.s32.totalorder %s26, 1
    %p371 = por %p369, %p370
    %p373 = scmp.ne.s32.totalorder %s356, %s372
    %p374 = scmp.eq.s32.totalorder %s26, 0
    %p375 = por %p373, %p374
    %s376 = ssub.s32 %s27, %s39
    %s377 = ssub.s32 %s28, %s35
    %s378 = sor.u32 %s376, %s377
    %p379 = scmp.eq.s32.totalorder %s378, 0
    %s381 = sadd.s32 %s380, 1
    %s382 = scalar_select %p379, %s380, %s381
    %p385 = pneg %p379
    %p386 = scmp.eq.s32.totalorder %s20, 1
    %p387 = por %p385, %p386
    %p388 = scmp.ne.s32.totalorder %s380, %s383
    %p389 = scmp.eq.s32.totalorder %s20, 0
    %p390 = por %p388, %p389
    %p391 = scmp.ne.s32.totalorder %s380, %s383
    %p392 = scmp.eq.s32.totalorder %s25, 1
    %p393 = por %p391, %p392
    %p394 = scmp.ne.s32.totalorder %s383, %s384
    %p395 = scmp.eq.s32.totalorder %s25, 0
    %p396 = por %p394, %p395
    %p397 = scmp.ne.s32.totalorder %s383, %s384
    %p398 = scmp.eq.s32.totalorder %s26, 1
    %p399 = por %p397, %p398
    %p401 = scmp.ne.s32.totalorder %s384, %s400
    %p402 = scmp.eq.s32.totalorder %s26, 0
    %p403 = por %p401, %p402
    %s404 = ssub.s32 %s27, %s39
    %s405 = ssub.s32 %s28, %s35
    %s406 = sor.u32 %s404, %s405
    %p407 = scmp.eq.s32.totalorder %s406, 0
    %s409 = sadd.s32 %s408, 1
    %s410 = scalar_select %p407, %s408, %s409
    %p413 = pneg %p407
    %p414 = scmp.eq.s32.totalorder %s20, 1
    %p415 = por %p413, %p414
    %p416 = scmp.ne.s32.totalorder %s408, %s411
    %p417 = scmp.eq.s32.totalorder %s20, 0
    %p418 = por %p416, %p417
    %p419 = scmp.ne.s32.totalorder %s408, %s411
    %p420 = scmp.eq.s32.totalorder %s25, 1
    %p421 = por %p419, %p420
    %p422 = scmp.ne.s32.totalorder %s411, %s412
    %p423 = scmp.eq.s32.totalorder %s25, 0
    %p424 = por %p422, %p423
    %p425 = scmp.ne.s32.totalorder %s411, %s412
    %p426 = scmp.eq.s32.totalorder %s26, 1
    %p427 = por %p425, %p426
    %p429 = scmp.ne.s32.totalorder %s412, %s428
    %p430 = scmp.eq.s32.totalorder %s26, 0
    %p431 = por %p429, %p430
    %p432 = scmp.le.s32.totalorder 1, %s20
    %p433 = scmp.lt.s32.totalorder %s20, 3
    %p434 = pnand %p432, %p433
    %p435 = pneg %p434
    // Predicated region
    $region9: #{loss_func_forward.1} parent=5 // pred_check
      _
    $region10: #{loss_func_forward.1} parent=5 // pred_check_branch
      %437 = sbr.rel (%p434) target = $region12
    $region11: #{loss_func_forward.1} parent=5 // pred_region
      %s438 = ssub.s32 %s20, 1
    $region12: #{loss_func_forward.1} parent=5 // pred_fallthru
      _
    %p439 = scmp.lt.s32.totalorder %s20, 2
    // Predicated region
    $region13: #{loss_func_forward.1} parent=5 // pred_check
      %p440 = pneg %p439
    $region14: #{loss_func_forward.1} parent=5 // pred_check_branch
      %442 = sbr.rel (%p440) target = $region16
    $region15: #{loss_func_forward.1} parent=5 // pred_region
      // Predicated region
      $region17: #{loss_func_forward.1} parent=15 // pred_check
        %p443 = pneg %p54
      $region18: #{loss_func_forward.1} parent=15 // pred_check_branch
        %445 = sbr.rel (%p443) target = $region20
      $region19: #{loss_func_forward.1} parent=15 // pred_region
        %p446 = scmp.lt.s32.totalorder %s27, 1
        %s447 = scalar_select %p446, %s27, 1
        %p448 = scmp.lt.s32.totalorder %s28, 0
        %s449 = scalar_select %p448, %s28, 0
        %s450 = smul.addr %s447, 3
        %s451 = sadd.s32 %s449, %s450
        %s452 = smul.addr %s451, 2
        %s453 = scalar_lea.vmem %s0, %s452
      $region20: #{loss_func_forward.1} parent=15 // pred_fallthru
        _
      // Predicated region
      $region21: #{loss_func_forward.1} parent=15 // pred_check
        %p454 = pneg %p82
      $region22: #{loss_func_forward.1} parent=15 // pred_check_branch
        %456 = sbr.rel (%p454) target = $region24
      $region23: #{loss_func_forward.1} parent=15 // pred_region
        %p457 = scmp.lt.s32.totalorder %s27, 1
        %s458 = scalar_select %p457, %s27, 1
        %p459 = scmp.lt.s32.totalorder %s28, 0
        %s460 = scalar_select %p459, %s28, 0
        %s461 = smul.addr %s458, 3
        %s462 = sadd.s32 %s460, %s461
        %s463 = smul.addr %s462, 2
        %s464 = scalar_lea.vmem %s1, %s463
      $region24: #{loss_func_forward.1} parent=15 // pred_fallthru
        _
      // Predicated region
      $region25: #{loss_func_forward.1} parent=15 // pred_check
        %p465 = pneg %p110
      $region26: #{loss_func_forward.1} parent=15 // pred_check_branch
        %467 = sbr.rel (%p465) target = $region28
      $region27: #{loss_func_forward.1} parent=15 // pred_region
        %p468 = scmp.lt.s32.totalorder %s27, 1
        %s469 = scalar_select %p468, %s27, 1
        %p470 = scmp.lt.s32.totalorder %s28, 0
        %s471 = scalar_select %p470, %s28, 0
        %s472 = smul.addr %s469, 3
        %s473 = sadd.s32 %s471, %s472
        %s474 = smul.addr %s473, 2
        %s475 = scalar_lea.vmem %s2, %s474
      $region28: #{loss_func_forward.1} parent=15 // pred_fallthru
        _
      // Predicated region
      $region29: #{loss_func_forward.1} parent=15 // pred_check
        %p476 = pneg %p138
      $region30: #{loss_func_forward.1} parent=15 // pred_check_branch
        %478 = sbr.rel (%p476) target = $region32
      $region31: #{loss_func_forward.1} parent=15 // pred_region
        %p479 = scmp.lt.s32.totalorder %s27, 1
        %s480 = scalar_select %p479, %s27, 1
        %p481 = scmp.lt.s32.totalorder %s28, 0
        %s482 = scalar_select %p481, %s28, 0
        %s483 = smul.addr %s480, 3
        %s484 = sadd.s32 %s482, %s483
        %s485 = smul.addr %s484, 2
        %s486 = scalar_lea.vmem %s3, %s485
      $region32: #{loss_func_forward.1} parent=15 // pred_fallthru
        _
      // Predicated region
      $region33: #{loss_func_forward.1} parent=15 // pred_check
        %p487 = pneg %p166
      $region34: #{loss_func_forward.1} parent=15 // pred_check_branch
        %489 = sbr.rel (%p487) target = $region36
      $region35: #{loss_func_forward.1} parent=15 // pred_region
        %p490 = scmp.lt.s32.totalorder %s27, 1
        %s491 = scalar_select %p490, %s27, 1
        %p492 = scmp.lt.s32.totalorder %s28, 0
        %s493 = scalar_select %p492, %s28, 0
        %s494 = smul.addr %s491, 2
        %s495 = sadd.s32 %s493, %s494
        %s496 = smul.addr %s495, 2
        %s497 = scalar_lea.vmem %s4, %s496
      $region36: #{loss_func_forward.1} parent=15 // pred_fallthru
        _
      // Predicated region
      $region37: #{loss_func_forward.1} parent=15 // pred_check
        %p498 = pneg %p194
      $region38: #{loss_func_forward.1} parent=15 // pred_check_branch
        %500 = sbr.rel (%p498) target = $region40
      $region39: #{loss_func_forward.1} parent=15 // pred_region
        %p501 = scmp.lt.s32.totalorder %s27, 1
        %s502 = scalar_select %p501, %s27, 1
        %p503 = scmp.lt.s32.totalorder %s28, 0
        %s504 = scalar_select %p503, %s28, 0
        %s505 = smul.addr %s502, 2
        %s506 = sadd.s32 %s504, %s505
        %s507 = smul.addr %s506, 2
        %s508 = scalar_lea.vmem %s5, %s507
      $region40: #{loss_func_forward.1} parent=15 // pred_fallthru
        _
      // Predicated region
      $region41: #{loss_func_forward.1} parent=15 // pred_check
        %p509 = pneg %p222
      $region42: #{loss_func_forward.1} parent=15 // pred_check_branch
        %511 = sbr.rel (%p509) target = $region44
      $region43: #{loss_func_forward.1} parent=15 // pred_region
        %p512 = scmp.lt.s32.totalorder %s27, 1
        %s513 = scalar_select %p512, %s27, 1
        %p514 = scmp.lt.s32.totalorder %s28, 0
        %s515 = scalar_select %p514, %s28, 0
        %s516 = smul.addr %s513, 2
        %s517 = sadd.s32 %s515, %s516
        %s518 = smul.addr %s517, 2
        %s519 = scalar_lea.vmem %s6, %s518
      $region44: #{loss_func_forward.1} parent=15 // pred_fallthru
        _
      // Predicated region
      $region45: #{loss_func_forward.1} parent=15 // pred_check
        %p520 = pneg %p250
      $region46: #{loss_func_forward.1} parent=15 // pred_check_branch
        %522 = sbr.rel (%p520) target = $region48
      $region47: #{loss_func_forward.1} parent=15 // pred_region
        %p523 = scmp.lt.s32.totalorder %s27, 1
        %s524 = scalar_select %p523, %s27, 1
        %p525 = scmp.lt.s32.totalorder %s28, 0
        %s526 = scalar_select %p525, %s28, 0
        %s527 = smul.addr %s524, 2
        %s528 = sadd.s32 %s526, %s527
        %s529 = smul.addr %s528, 2
        %s530 = scalar_lea.vmem %s7, %s529
      $region48: #{loss_func_forward.1} parent=15 // pred_fallthru
        _
      // Predicated region
      $region49: #{loss_func_forward.1} parent=15 // pred_check
        %p531 = pneg %p278
      $region50: #{loss_func_forward.1} parent=15 // pred_check_branch
        %533 = sbr.rel (%p531) target = $region52
      $region51: #{loss_func_forward.1} parent=15 // pred_region
        %p534 = scmp.lt.s32.totalorder %s27, 1
        %s535 = scalar_select %p534, %s27, 1
        %p536 = scmp.lt.s32.totalorder %s28, 0
        %s537 = scalar_select %p536, %s28, 0
        %s538 = smul.addr %s535, 2
        %s539 = sadd.s32 %s537, %s538
        %s540 = smul.addr %s539, 2
        %s541 = scalar_lea.vmem %s8, %s540
      $region52: #{loss_func_forward.1} parent=15 // pred_fallthru
        _
      // Predicated region
      $region53: #{loss_func_forward.1} parent=15 // pred_check
        %p542 = pneg %p306
      $region54: #{loss_func_forward.1} parent=15 // pred_check_branch
        %544 = sbr.rel (%p542) target = $region56
      $region55: #{loss_func_forward.1} parent=15 // pred_region
        %p545 = scmp.lt.s32.totalorder %s27, 1
        %s546 = scalar_select %p545, %s27, 1
        %p547 = scmp.lt.s32.totalorder %s28, 0
        %s548 = scalar_select %p547, %s28, 0
        %s549 = smul.addr %s546, 2
        %s550 = sadd.s32 %s548, %s549
        %s551 = smul.addr %s550, 2
        %s552 = scalar_lea.vmem %s9, %s551
      $region56: #{loss_func_forward.1} parent=15 // pred_fallthru
        _
    $region16: #{loss_func_forward.1} parent=5 // pred_fallthru
      _
    %p553 = scmp.le.s32.totalorder 1, %s20
    %p554 = scmp.lt.s32.totalorder %s20, 3
    %p555 = pnand %p553, %p554
    %p556 = pneg %p555
    // Predicated region
    $region57: #{loss_func_forward.1} parent=5 // pred_check
      _
    $region58: #{loss_func_forward.1} parent=5 // pred_check_branch
      %558 = sbr.rel (%p555) target = $region60
    $region59: #{loss_func_forward.1} parent=5 // pred_region
      %s559 = ssub.s32 %s20, 1
      %p560 = scmp.lt.s32.totalorder %s29, 1
      %s561 = scalar_select %p560, %s29, 1
      %p562 = scmp.lt.s32.totalorder %s30, 0
      %s563 = scalar_select %p562, %s30, 0
      %s564 = smul.addr %s561, 3
      %s565 = sadd.s32 %s563, %s564
      %s566 = smul.addr %s565, 2
      %s567 = scalar_lea.vmem %s0, %s566
      %p568 = pneg %p60
      %p569 = pneg %p57
      %p570 = scmp.lt.s32.totalorder %s29, 1
      %s571 = scalar_select %p570, %s29, 1
      %p572 = scmp.lt.s32.totalorder %s30, 0
      %s573 = scalar_select %p572, %s30, 0
      %s574 = smul.addr %s571, 3
      %s575 = sadd.s32 %s573, %s574
      %s576 = smul.addr %s575, 2
      %s577 = scalar_lea.vmem %s1, %s576
      %p578 = pneg %p88
      %p579 = pneg %p85
      %p580 = scmp.lt.s32.totalorder %s29, 1
      %s581 = scalar_select %p580, %s29, 1
      %p582 = scmp.lt.s32.totalorder %s30, 0
      %s583 = scalar_select %p582, %s30, 0
      %s584 = smul.addr %s581, 3
      %s585 = sadd.s32 %s583, %s584
      %s586 = smul.addr %s585, 2
      %s587 = scalar_lea.vmem %s2, %s586
      %p588 = pneg %p116
      %p589 = pneg %p113
      %p590 = scmp.lt.s32.totalorder %s29, 1
      %s591 = scalar_select %p590, %s29, 1
      %p592 = scmp.lt.s32.totalorder %s30, 0
      %s593 = scalar_select %p592, %s30, 0
      %s594 = smul.addr %s591, 3
      %s595 = sadd.s32 %s593, %s594
      %s596 = smul.addr %s595, 2
      %s597 = scalar_lea.vmem %s3, %s596
      %p598 = pneg %p144
      %p599 = pneg %p141
      %p600 = scmp.lt.s32.totalorder %s29, 1
      %s601 = scalar_select %p600, %s29, 1
      %p602 = scmp.lt.s32.totalorder %s30, 0
      %s603 = scalar_select %p602, %s30, 0
      %s604 = smul.addr %s601, 2
      %s605 = sadd.s32 %s603, %s604
      %s606 = smul.addr %s605, 2
      %s607 = scalar_lea.vmem %s4, %s606
      %p608 = pneg %p172
      %p609 = pneg %p169
      %p610 = scmp.lt.s32.totalorder %s29, 1
      %s611 = scalar_select %p610, %s29, 1
      %p612 = scmp.lt.s32.totalorder %s30, 0
      %s613 = scalar_select %p612, %s30, 0
      %s614 = smul.addr %s611, 2
      %s615 = sadd.s32 %s613, %s614
      %s616 = smul.addr %s615, 2
      %s617 = scalar_lea.vmem %s5, %s616
      %p618 = pneg %p200
      %p619 = pneg %p197
      %p620 = scmp.lt.s32.totalorder %s29, 1
      %s621 = scalar_select %p620, %s29, 1
      %p622 = scmp.lt.s32.totalorder %s30, 0
      %s623 = scalar_select %p622, %s30, 0
      %s624 = smul.addr %s621, 2
      %s625 = sadd.s32 %s623, %s624
      %s626 = smul.addr %s625, 2
      %s627 = scalar_lea.vmem %s6, %s626
      %p628 = pneg %p228
      %p629 = pneg %p225
      %p630 = scmp.lt.s32.totalorder %s29, 1
      %s631 = scalar_select %p630, %s29, 1
      %p632 = scmp.lt.s32.totalorder %s30, 0
      %s633 = scalar_select %p632, %s30, 0
      %s634 = smul.addr %s631, 2
      %s635 = sadd.s32 %s633, %s634
      %s636 = smul.addr %s635, 2
      %s637 = scalar_lea.vmem %s7, %s636
      %p638 = pneg %p256
      %p639 = pneg %p253
      %p640 = scmp.lt.s32.totalorder %s29, 1
      %s641 = scalar_select %p640, %s29, 1
      %p642 = scmp.lt.s32.totalorder %s30, 0
      %s643 = scalar_select %p642, %s30, 0
      %s644 = smul.addr %s641, 2
      %s645 = sadd.s32 %s643, %s644
      %s646 = smul.addr %s645, 2
      %s647 = scalar_lea.vmem %s8, %s646
      %p648 = pneg %p284
      %p649 = pneg %p281
      %p650 = scmp.lt.s32.totalorder %s29, 1
      %s651 = scalar_select %p650, %s29, 1
      %p652 = scmp.lt.s32.totalorder %s30, 0
      %s653 = scalar_select %p652, %s30, 0
      %s654 = smul.addr %s651, 2
      %s655 = sadd.s32 %s653, %s654
      %s656 = smul.addr %s655, 2
      %s657 = scalar_lea.vmem %s9, %s656
      %p658 = pneg %p312
      %p659 = pneg %p309
      %p660 = pneg %p340
      %p661 = pneg %p337
      %p662 = scmp.lt.s32.totalorder %s29, 1
      %s663 = scalar_select %p662, %s29, 1
      %p664 = scmp.lt.s32.totalorder %s30, 0
      %s665 = scalar_select %p664, %s30, 0
      %s666 = sadd.s32 %s665, %s663
      %s667 = smul.addr %s666, 2
      %s668 = scalar_lea.vmem %s10, %s667
      %p669 = pneg %p368
      %p670 = pneg %p365
      %p671 = scmp.lt.s32.totalorder %s29, 1
      %s672 = scalar_select %p671, %s29, 1
      %p673 = scmp.lt.s32.totalorder %s30, 0
      %s674 = scalar_select %p673, %s30, 0
      %s675 = sadd.s32 %s674, %s672
      %s676 = smul.addr %s675, 2
      %s677 = scalar_lea.vmem %s11, %s676
      %p678 = pneg %p396
      %p679 = pneg %p393
      %p680 = scmp.lt.s32.totalorder %s29, 1
      %s681 = scalar_select %p680, %s29, 1
      %p682 = scmp.lt.s32.totalorder %s30, 0
      %s683 = scalar_select %p682, %s30, 0
      %s684 = sadd.s32 %s683, %s681
      %s685 = smul.addr %s684, 2
      %s686 = scalar_lea.vmem %s12, %s685
      %p687 = pneg %p424
      %p688 = pneg %p421
      %p689 = scmp.lt.s32.totalorder %s29, 1
      %s690 = scalar_select %p689, %s29, 1
      %p691 = scmp.lt.s32.totalorder %s30, 0
      %s692 = scalar_select %p691, %s30, 0
      %s693 = sadd.s32 %s692, %s690
      %s694 = smul.addr %s693, 2
      %s695 = scalar_lea.vmem %s13, %s694
      %p696 = scmp.lt.s32.totalorder %s29, 1
      %s697 = scalar_select %p696, %s29, 1
      %p698 = scmp.lt.s32.totalorder %s30, 0
      %s699 = scalar_select %p698, %s30, 0
      %s700 = smul.addr %s697, 3
      %s701 = sadd.s32 %s699, %s700
      %s702 = smul.addr %s701, 2
      %s703 = scalar_lea.vmem %s0, %s702
      %p704 = scmp.lt.s32.totalorder %s29, 1
      %s705 = scalar_select %p704, %s29, 1
      %p706 = scmp.lt.s32.totalorder %s30, 0
      %s707 = scalar_select %p706, %s30, 0
      %s708 = smul.addr %s705, 3
      %s709 = sadd.s32 %s707, %s708
      %s710 = smul.addr %s709, 2
      %s711 = scalar_lea.vmem %s1, %s710
      %p712 = scmp.lt.s32.totalorder %s29, 1
      %s713 = scalar_select %p712, %s29, 1
      %p714 = scmp.lt.s32.totalorder %s30, 0
      %s715 = scalar_select %p714, %s30, 0
      %s716 = smul.addr %s713, 3
      %s717 = sadd.s32 %s715, %s716
      %s718 = smul.addr %s717, 2
      %s719 = scalar_lea.vmem %s2, %s718
      %p720 = scmp.lt.s32.totalorder %s29, 1
      %s721 = scalar_select %p720, %s29, 1
      %p722 = scmp.lt.s32.totalorder %s30, 0
      %s723 = scalar_select %p722, %s30, 0
      %s724 = smul.addr %s721, 3
      %s725 = sadd.s32 %s723, %s724
      %s726 = smul.addr %s725, 2
      %s727 = scalar_lea.vmem %s3, %s726
      %p728 = scmp.lt.s32.totalorder %s29, 1
      %s729 = scalar_select %p728, %s29, 1
      %p730 = scmp.lt.s32.totalorder %s30, 0
      %s731 = scalar_select %p730, %s30, 0
      %s732 = smul.addr %s729, 2
      %s733 = sadd.s32 %s731, %s732
      %s734 = smul.addr %s733, 2
      %s735 = scalar_lea.vmem %s4, %s734
      %p736 = scmp.lt.s32.totalorder %s29, 1
      %s737 = scalar_select %p736, %s29, 1
      %p738 = scmp.lt.s32.totalorder %s30, 0
      %s739 = scalar_select %p738, %s30, 0
      %s740 = smul.addr %s737, 2
      %s741 = sadd.s32 %s739, %s740
      %s742 = smul.addr %s741, 2
      %s743 = scalar_lea.vmem %s5, %s742
      %p744 = scmp.lt.s32.totalorder %s29, 1
      %s745 = scalar_select %p744, %s29, 1
      %p746 = scmp.lt.s32.totalorder %s30, 0
      %s747 = scalar_select %p746, %s30, 0
      %s748 = smul.addr %s745, 2
      %s749 = sadd.s32 %s747, %s748
      %s750 = smul.addr %s749, 2
      %s751 = scalar_lea.vmem %s6, %s750
      %p752 = scmp.lt.s32.totalorder %s29, 1
      %s753 = scalar_select %p752, %s29, 1
      %p754 = scmp.lt.s32.totalorder %s30, 0
      %s755 = scalar_select %p754, %s30, 0
      %s756 = smul.addr %s753, 2
      %s757 = sadd.s32 %s755, %s756
      %s758 = smul.addr %s757, 2
      %s759 = scalar_lea.vmem %s7, %s758
      %p760 = scmp.lt.s32.totalorder %s29, 1
      %s761 = scalar_select %p760, %s29, 1
      %p762 = scmp.lt.s32.totalorder %s30, 0
      %s763 = scalar_select %p762, %s30, 0
      %s764 = smul.addr %s761, 2
      %s765 = sadd.s32 %s763, %s764
      %s766 = smul.addr %s765, 2
      %s767 = scalar_lea.vmem %s8, %s766
      %p768 = scmp.lt.s32.totalorder %s29, 1
      %s769 = scalar_select %p768, %s29, 1
      %p770 = scmp.lt.s32.totalorder %s30, 0
      %s771 = scalar_select %p770, %s30, 0
      %s772 = smul.addr %s769, 2
      %s773 = sadd.s32 %s771, %s772
      %s774 = smul.addr %s773, 2
      %s775 = scalar_lea.vmem %s9, %s774
      %p776 = scmp.lt.s32.totalorder %s29, 1
      %s777 = scalar_select %p776, %s29, 1
      %p778 = scmp.lt.s32.totalorder %s30, 0
      %s779 = scalar_select %p778, %s30, 0
      %s780 = sadd.s32 %s779, %s777
      %s781 = smul.addr %s780, 2
      %s782 = scalar_lea.vmem %s10, %s781
      %p783 = scmp.lt.s32.totalorder %s29, 1
      %s784 = scalar_select %p783, %s29, 1
      %p785 = scmp.lt.s32.totalorder %s30, 0
      %s786 = scalar_select %p785, %s30, 0
      %s787 = sadd.s32 %s786, %s784
      %s788 = smul.addr %s787, 2
      %s789 = scalar_lea.vmem %s11, %s788
      %p790 = scmp.lt.s32.totalorder %s29, 1
      %s791 = scalar_select %p790, %s29, 1
      %p792 = scmp.lt.s32.totalorder %s30, 0
      %s793 = scalar_select %p792, %s30, 0
      %s794 = sadd.s32 %s793, %s791
      %s795 = smul.addr %s794, 2
      %s796 = scalar_lea.vmem %s12, %s795
      %p797 = scmp.lt.s32.totalorder %s29, 1
      %s798 = scalar_select %p797, %s29, 1
      %p799 = scmp.lt.s32.totalorder %s30, 0
      %s800 = scalar_select %p799, %s30, 0
      %s801 = sadd.s32 %s800, %s798
      %s802 = smul.addr %s801, 2
      %s803 = scalar_lea.vmem %s13, %s802
      %v804 = vld [vmem:[%s703] sm:$0x3]
      %v805 = vld [vmem:[%s703 + $0x2] sm:$0x3]
      %v806 = vld [vmem:[%s703 + $0x4] sm:$0x3]
      %v807 = vld [vmem:[%s711] sm:$0x3]
      %v808 = vld [vmem:[%s711 + $0x2] sm:$0x3]
      %v809 = vld [vmem:[%s711 + $0x4] sm:$0x3]
      %v810 = vsub.f32 %v804, %v807
      %v811 = vsub.f32 %v805, %v808
      %v812 = vsub.f32 %v806, %v809
      %v813 = vand.u32 2147483647, %v810
      %v814 = vand.u32 2147483647, %v811
      %v815 = vand.u32 2147483647, %v812
      %vm816 = vcmask 1041408
      %v817 = vsel %vm816, %v813, 0.0
      %v818 = vsel %vm816, %v814, 0.0
      %v819 = vadd.f32 %v817, %v818
      %v820 = vsel %vm816, %v815, 0.0
      %v821 = vadd.f32 %v819, %v820
      %822 = vst [vmem:[%s782] sm:$0x3] %v821
      %v823 = vld [vmem:[%s703] sm:$0x3]
      %v824 = vld [vmem:[%s703 + $0x2] sm:$0x3]
      %v825 = vld [vmem:[%s703 + $0x4] sm:$0x3]
      %v826 = vld [vmem:[%s719] sm:$0x3]
      %v827 = vld [vmem:[%s719 + $0x2] sm:$0x3]
      %v828 = vld [vmem:[%s719 + $0x4] sm:$0x3]
      %v829 = vsub.f32 %v823, %v826
      %v830 = vsub.f32 %v824, %v827
      %v831 = vsub.f32 %v825, %v828
      %v832 = vld [vmem:[%s711] sm:$0x3]
      %v833 = vld [vmem:[%s711 + $0x2] sm:$0x3]
      %v834 = vld [vmem:[%s711 + $0x4] sm:$0x3]
      %v835 = vld [vmem:[%s727] sm:$0x3]
      %v836 = vld [vmem:[%s727 + $0x2] sm:$0x3]
      %v837 = vld [vmem:[%s727 + $0x4] sm:$0x3]
      %v838 = vsub.f32 %v832, %v835
      %v839 = vsub.f32 %v833, %v836
      %v840 = vsub.f32 %v834, %v837
      %v841 = vsub.f32 %v829, %v838
      %v842 = vsub.f32 %v830, %v839
      %v843 = vsub.f32 %v831, %v840
      %v844 = vand.u32 2147483647, %v841
      %v845 = vand.u32 2147483647, %v842
      %v846 = vand.u32 2147483647, %v843
      %v847 = vsel %vm816, %v844, 0.0
      %v848 = vsel %vm816, %v845, 0.0
      %v849 = vadd.f32 %v847, %v848
      %v850 = vsel %vm816, %v846, 0.0
      %v851 = vadd.f32 %v849, %v850
      %852 = vst [vmem:[%s789] sm:$0x3] %v851
      %v853 = vld [vmem:[%s743] sm:$0x3]
      %v854 = vld [vmem:[%s743 + $0x2] sm:$0x3]
      %v855 = vld [vmem:[%s735] sm:$0x3]
      %v856 = vld [vmem:[%s735 + $0x2] sm:$0x3]
      %v857 = vsub.f32 %v853, %v855
      %v858 = vsub.f32 %v854, %v856
      %v859 = vand.u32 2147483647, %v857
      %v860 = vand.u32 2147483647, %v858
      %vm861 = vcmp.gt.f32.partialorder %v859, 0.5
      %vm862 = vcmp.gt.f32.partialorder %v860, 0.5
      %v863 = vsel %vm861, 1.0, 0.0
      %v864 = vsel %vm862, 1.0, 0.0
      %v865 = vadd.f32 %v863, %v864
      %vm866 = vcmp.gt.f32.partialorder %v865, 0.0
      %v867 = vsel %vm866, 1.0, 0.0
      %v868 = vld [vmem:[%s759] sm:$0x3]
      %v869 = vld [vmem:[%s759 + $0x2] sm:$0x3]
      %v870 = vld [vmem:[%s751] sm:$0x3]
      %v871 = vld [vmem:[%s751 + $0x2] sm:$0x3]
      %v872 = vsub.f32 %v868, %v870
      %v873 = vsub.f32 %v869, %v871
      %v874 = vand.u32 2147483647, %v872
      %v875 = vand.u32 2147483647, %v873
      %vm876 = vcmp.gt.f32.partialorder %v874, 0.5
      %vm877 = vcmp.gt.f32.partialorder %v875, 0.5
      %v878 = vsel %vm876, 1.0, 0.0
      %v879 = vsel %vm877, 1.0, 0.0
      %v880 = vadd.f32 %v878, %v879
      %vm881 = vcmp.gt.f32.partialorder %v880, 0.0
      %v882 = vsel %vm881, 0.8, 0.0
      %v883 = vadd.f32 %v867, %v882
      %v884 = vld [vmem:[%s775] sm:$0x3]
      %v885 = vld [vmem:[%s775 + $0x2] sm:$0x3]
      %v886 = vld [vmem:[%s767] sm:$0x3]
      %v887 = vld [vmem:[%s767 + $0x2] sm:$0x3]
      %v888 = vsub.f32 %v884, %v886
      %v889 = vsub.f32 %v885, %v887
      %v890 = vand.u32 2147483647, %v888
      %v891 = vand.u32 2147483647, %v889
      %vm892 = vcmp.gt.f32.partialorder %v890, 0.5
      %vm893 = vcmp.gt.f32.partialorder %v891, 0.5
      %v894 = vsel %vm892, 1.0, 0.0
      %v895 = vsel %vm893, 1.0, 0.0
      %v896 = vadd.f32 %v894, %v895
      %vm897 = vcmp.gt.f32.partialorder %v896, 0.0
      %v898 = vsel %vm897, 0.6, 0.0
      %v899 = vadd.f32 %v883, %v898
      %v900 = vld [vmem:[%s703] sm:$0x3]
      %v901 = vld [vmem:[%s703 + $0x2] sm:$0x3]
      %v902 = vld [vmem:[%s703 + $0x4] sm:$0x3]
      %v903 = vld [vmem:[%s711] sm:$0x3]
      %v904 = vld [vmem:[%s711 + $0x2] sm:$0x3]
      %v905 = vld [vmem:[%s711 + $0x4] sm:$0x3]
      %v906 = vsub.f32 %v900, %v903
      %v907 = vsub.f32 %v901, %v904
      %v908 = vsub.f32 %v902, %v905
      %v909 = vand.u32 2147483647, %v906
      %v910 = vand.u32 2147483647, %v907
      %v911 = vand.u32 2147483647, %v908
      %v912 = vmul.f32 %v909, %v899
      %v913 = vmul.f32 %v910, %v899
      %v914 = vmul.f32 %v911, %v899
      %vm915 = vcmp.gt.f32.partialorder %v912, 0.0
      %vm916 = vcmp.gt.f32.partialorder %v913, 0.0
      %vm917 = vcmp.gt.f32.partialorder %v914, 0.0
      %v918 = vsel %vm915, %v912, 0.0
      %v919 = vsel %vm916, %v913, 0.0
      %v920 = vsel %vm917, %v914, 0.0
      %v921 = vsel %vm816, %v918, 0.0
      %v922 = vsel %vm816, %v919, 0.0
      %v923 = vadd.f32 %v921, %v922
      %v924 = vsel %vm816, %v920, 0.0
      %v925 = vadd.f32 %v923, %v924
      %926 = vst [vmem:[%s796] sm:$0x3] %v925
      %v927 = vsel %vm915, 1, 0
      %v928 = vsel %vm916, 1, 0
      %v929 = vsel %vm917, 1, 0
      %v930 = vsel %vm816, %v927, 0
      %v931 = vsel %vm816, %v928, 0
      %v932 = vsel %vm816, %v929, 0
      %v933 = vadd.s32 %v930, %v931
      %v934 = vadd.s32 %v933, %v932
      %935 = vst [vmem:[%s803] sm:$0x3] %v934
      %p936 = scmp.lt.s32.totalorder %s29, 1
      %s937 = scalar_select %p936, %s29, 1
      %p938 = scmp.lt.s32.totalorder %s30, 0
      %s939 = scalar_select %p938, %s30, 0
      %s940 = sadd.s32 %s939, %s937
      %s941 = smul.addr %s940, 2
      %s942 = scalar_lea.vmem %s10, %s941
      %p943 = scmp.lt.s32.totalorder %s29, 1
      %s944 = scalar_select %p943, %s29, 1
      %p945 = scmp.lt.s32.totalorder %s30, 0
      %s946 = scalar_select %p945, %s30, 0
      %s947 = sadd.s32 %s946, %s944
      %s948 = smul.addr %s947, 2
      %s949 = scalar_lea.vmem %s11, %s948
      %p950 = scmp.lt.s32.totalorder %s29, 1
      %s951 = scalar_select %p950, %s29, 1
      %p952 = scmp.lt.s32.totalorder %s30, 0
      %s953 = scalar_select %p952, %s30, 0
      %s954 = sadd.s32 %s953, %s951
      %s955 = smul.addr %s954, 2
      %s956 = scalar_lea.vmem %s12, %s955
      %p957 = scmp.lt.s32.totalorder %s29, 1
      %s958 = scalar_select %p957, %s29, 1
      %p959 = scmp.lt.s32.totalorder %s30, 0
      %s960 = scalar_select %p959, %s30, 0
      %s961 = sadd.s32 %s960, %s958
      %s962 = smul.addr %s961, 2
      %s963 = scalar_lea.vmem %s13, %s962
      // Predicated region
      $region61: #{loss_func_forward.1} parent=59 // pred_check
        %p964 = pneg %p337
      $region62: #{loss_func_forward.1} parent=59 // pred_check_branch
        %966 = sbr.rel (%p964) target = $region64
      $region63: #{loss_func_forward.1} parent=59 // pred_region
        _
      $region64: #{loss_func_forward.1} parent=59 // pred_fallthru
        _
      // Predicated region
      $region65: #{loss_func_forward.1} parent=59 // pred_check
        %p967 = pneg %p365
      $region66: #{loss_func_forward.1} parent=59 // pred_check_branch
        %969 = sbr.rel (%p967) target = $region68
      $region67: #{loss_func_forward.1} parent=59 // pred_region
        _
      $region68: #{loss_func_forward.1} parent=59 // pred_fallthru
        _
      // Predicated region
      $region69: #{loss_func_forward.1} parent=59 // pred_check
        %p970 = pneg %p393
      $region70: #{loss_func_forward.1} parent=59 // pred_check_branch
        %972 = sbr.rel (%p970) target = $region72
      $region71: #{loss_func_forward.1} parent=59 // pred_region
        _
      $region72: #{loss_func_forward.1} parent=59 // pred_fallthru
        _
      // Predicated region
      $region73: #{loss_func_forward.1} parent=59 // pred_check
        %p973 = pneg %p421
      $region74: #{loss_func_forward.1} parent=59 // pred_check_branch
        %975 = sbr.rel (%p973) target = $region76
      $region75: #{loss_func_forward.1} parent=59 // pred_region
        _
      $region76: #{loss_func_forward.1} parent=59 // pred_fallthru
        _
    $region60: #{loss_func_forward.1} parent=5 // pred_fallthru
      _
    %p976 = scmp.le.s32.totalorder 2, %s20
    // Predicated region
    $region77: #{loss_func_forward.1} parent=5 // pred_check
      %p977 = pneg %p976
    $region78: #{loss_func_forward.1} parent=5 // pred_check_branch
      %979 = sbr.rel (%p977) target = $region80
    $region79: #{loss_func_forward.1} parent=5 // pred_region
      %s980 = ssub.s32 %s20, 2
      // Predicated region
      $region81: #{loss_func_forward.1} parent=79 // pred_check
        %p981 = pneg %p343
      $region82: #{loss_func_forward.1} parent=79 // pred_check_branch
        %983 = sbr.rel (%p981) target = $region84
      $region83: #{loss_func_forward.1} parent=79 // pred_region
        %p984 = scmp.lt.s32.totalorder %s31, 1
        %s985 = scalar_select %p984, %s31, 1
        %p986 = scmp.lt.s32.totalorder %s32, 0
        %s987 = scalar_select %p986, %s32, 0
        %s988 = sadd.s32 %s987, %s985
        %s989 = smul.addr %s988, 2
        %s990 = scalar_lea.vmem %s10, %s989
      $region84: #{loss_func_forward.1} parent=79 // pred_fallthru
        _
      // Predicated region
      $region85: #{loss_func_forward.1} parent=79 // pred_check
        %p991 = pneg %p371
      $region86: #{loss_func_forward.1} parent=79 // pred_check_branch
        %993 = sbr.rel (%p991) target = $region88
      $region87: #{loss_func_forward.1} parent=79 // pred_region
        %p994 = scmp.lt.s32.totalorder %s31, 1
        %s995 = scalar_select %p994, %s31, 1
        %p996 = scmp.lt.s32.totalorder %s32, 0
        %s997 = scalar_select %p996, %s32, 0
        %s998 = sadd.s32 %s997, %s995
        %s999 = smul.addr %s998, 2
        %s1000 = scalar_lea.vmem %s11, %s999
      $region88: #{loss_func_forward.1} parent=79 // pred_fallthru
        _
      // Predicated region
      $region89: #{loss_func_forward.1} parent=79 // pred_check
        %p1001 = pneg %p399
      $region90: #{loss_func_forward.1} parent=79 // pred_check_branch
        %1003 = sbr.rel (%p1001) target = $region92
      $region91: #{loss_func_forward.1} parent=79 // pred_region
        %p1004 = scmp.lt.s32.totalorder %s31, 1
        %s1005 = scalar_select %p1004, %s31, 1
        %p1006 = scmp.lt.s32.totalorder %s32, 0
        %s1007 = scalar_select %p1006, %s32, 0
        %s1008 = sadd.s32 %s1007, %s1005
        %s1009 = smul.addr %s1008, 2
        %s1010 = scalar_lea.vmem %s12, %s1009
      $region92: #{loss_func_forward.1} parent=79 // pred_fallthru
        _
      // Predicated region
      $region93: #{loss_func_forward.1} parent=79 // pred_check
        %p1011 = pneg %p427
      $region94: #{loss_func_forward.1} parent=79 // pred_check_branch
        %1013 = sbr.rel (%p1011) target = $region96
      $region95: #{loss_func_forward.1} parent=79 // pred_region
        %p1014 = scmp.lt.s32.totalorder %s31, 1
        %s1015 = scalar_select %p1014, %s31, 1
        %p1016 = scmp.lt.s32.totalorder %s32, 0
        %s1017 = scalar_select %p1016, %s32, 0
        %s1018 = sadd.s32 %s1017, %s1015
        %s1019 = smul.addr %s1018, 2
        %s1020 = scalar_lea.vmem %s13, %s1019
      $region96: #{loss_func_forward.1} parent=79 // pred_fallthru
        _
    $region80: #{loss_func_forward.1} parent=5 // pred_fallthru
      _
  $region6: #{loss_func_forward.1} parent=0 // loop_footer
    %s24 = sadd.s32 1, %s20
  $region7: #{loss_func_forward.1} parent=0 // loop_footer_branch
    %19 = sbr.rel target = $region3
  $region8: #{loss_func_forward.1} parent=0 // loop_exit
    _

</llo_original>
